<compile_context>
chip_gen: v6e
topology: v6e:2x2x1
jax: 0.10.0
libtpu: 0.0.40
codegen_flags: <defaults>
</compile_context>

<pallas_src>
import functools

import numpy as np
import jax
import jax.numpy as jnp
from jax import lax
from jax.experimental import pallas as pl
from jax.experimental.pallas import tpu as pltpu


def _convlstm_kernel(xh_ref, mask_ref, w_ref, b_ref, c_ref,
                     hnext_ref, cnext_ref, *, HID, KH, KW, W, PAD, BHW):
    """Single invocation (grid=(1,)).

    xh_ref    : (C, 2*PAD + B*HW) bf16   concat([x, h]) channel-major, (b,h,w)
                                          flattened on the lane axis, zero-padded
                                          by PAD = ph*W + pw on both ends.
    mask_ref  : (KH*KW, B*HW)     bf16   per-tap validity mask (0/1).
    w_ref     : (KH*KW, 4*HID, C) bf16   fused conv weight, gate order [i,f,g,o].
    b_ref     : (4*HID, 1)        f32    fused bias (bx + bh).
    c_ref     : (HID, B*HW)       f32    current cell state.
    hnext_ref : (HID, B*HW)              x.dtype
    cnext_ref : (HID, B*HW)       f32
    """
    ph, pw = KH // 2, KW // 2
    C4 = 4 * HID

    # Bias folded into the f32 accumulator init (lane-broadcast, hoisted).
    gates = jnp.broadcast_to(b_ref[...], (C4, BHW))               # (4*HID, BHW) f32

    # Sum of KH*KW small MXU matmuls, one per conv tap: (4*HID, C) @ (C, B*HW).
    # Each tap's RHS is a statically shifted window of the padded xh slab,
    # zeroed at invalid (out-of-image / cross-batch) positions by the mask.
    t = 0
    for di in range(KH):
        for dj in range(KW):
            shift = (di - ph) * W + (dj - pw)
            win = xh_ref[:, pl.ds(PAD + shift, BHW)]              # (C, BHW) bf16
            m = mask_ref[pl.ds(t, 1), :]                          # (1, BHW) bf16
            gates = gates + jnp.dot(w_ref[t], win * m,
                                    preferred_element_type=jnp.float32)
            t += 1

    # Gate order along rows: i, f, g(=c), o  (matches torch.split(dim=1)).
    # HID is a multiple of 8, so every gate slice is sublane-aligned.
    i = jax.nn.sigmoid(gates[0 * HID:1 * HID])
    f = jax.nn.sigmoid(gates[1 * HID:2 * HID])
    g = jnp.tanh(gates[2 * HID:3 * HID])
    o = jax.nn.sigmoid(gates[3 * HID:4 * HID])

    c_cur = c_ref[...]                                            # (HID, BHW) f32
    c_next = f * c_cur + i * g
    h_next = o * jnp.tanh(c_next)

    hnext_ref[...] = h_next.astype(hnext_ref.dtype)
    cnext_ref[...] = c_next                                       # stays f32


@jax.jit
def conv_lstm_cell(x, h_cur, c_cur, wx, wh, bx, bh):
    """ConvLSTMCell.forward (NCHW in / NCHW out, like the PyTorch module).

    x      : (B, CIN, H, W)
    h_cur  : (B, HID, H, W)
    c_cur  : (B, HID, H, W)
    wx     : (KH, KW, CIN, 4*HID)   HWIO input_conv weight
    wh     : (KH, KW, HID, 4*HID)   HWIO rnn_conv weight
    bx, bh : (4*HID,)
    returns (h_next, c_next), each (B, HID, H, W); c_next is float32.
    """
    B, CIN, H, W = x.shape
    KH, KW, _, C4 = wx.shape
    HID = C4 // 4
    C = CIN + HID
    ph, pw = KH // 2, KW // 2
    HW = H * W
    BHW = B * HW
    PAD = ph * W + pw          # max |flattened tap shift|
    KT = KH * KW

    if HID % 8 != 0:
        # TODO(synk): pad 4*HID up to a multiple of 32 for non-default hidden_dim.
        raise NotImplementedError(
            "hidden_dim must be a multiple of 8 so gate slices stay sublane-aligned")

    # concat([x, h]) -> channel-major, batch folded into the lane axis, then a
    # PAD-wide zero border on the flattened axis for the shifted-window loads.
    xh = jnp.concatenate([x, h_cur], axis=1).astype(jnp.bfloat16)    # (B, C, H, W)
    xh = jnp.transpose(xh, (1, 0, 2, 3)).reshape(C, BHW)             # (C, B*HW)
    xh = jnp.pad(xh, ((0, 0), (PAD, PAD)))                           # (C, 2*PAD+B*HW)

    # Fused conv weight: one (4*HID, C) slab per tap (t = di*KW + dj); bias pre-summed.
    w_cat = jnp.concatenate([wx, wh], axis=2)                        # (KH, KW, C, C4)
    w_taps = jnp.transpose(w_cat.reshape(KT, C, C4),
                           (0, 2, 1)).astype(jnp.bfloat16)           # (KT, C4, C)
    b_all = (bx + bh).reshape(C4, 1).astype(jnp.float32)

    # Per-tap validity mask (trace-time numpy constant): 1 where the tap lands
    # inside the image for that output pixel, 0 otherwise (borders & batch seams).
    hw = np.arange(HW)
    ii, jj = hw // W, hw % W
    mask_np = np.empty((KT, BHW), np.float32)
    t = 0
    for di in range(KH):
        for dj in range(KW):
            valid = ((ii + di - ph >= 0) & (ii + di - ph < H) &
                     (jj + dj - pw >= 0) & (jj + dj - pw < W))
            mask_np[t] = np.tile(valid.astype(np.float32), B)
            t += 1
    mask = jnp.asarray(mask_np, dtype=jnp.bfloat16)

    # Cell state: channel-major, batch folded into lanes; kept float32.
    c_flat = jnp.transpose(c_cur, (1, 0, 2, 3)).reshape(HID, BHW).astype(jnp.float32)

    kernel = functools.partial(_convlstm_kernel, HID=HID, KH=KH, KW=KW,
                               W=W, PAD=PAD, BHW=BHW)

    out_shape = (jax.ShapeDtypeStruct((HID, BHW), x.dtype),       # h_next
                 jax.ShapeDtypeStruct((HID, BHW), jnp.float32))   # c_next (pinned f32)

    h_next, c_next = pl.pallas_call(
        kernel,
        out_shape=out_shape,
        grid=(1,),
        in_specs=[
            pl.BlockSpec((C, 2 * PAD + BHW), lambda i: (0, 0)),
            pl.BlockSpec((KT, BHW), lambda i: (0, 0)),
            pl.BlockSpec((KT, C4, C), lambda i: (0, 0, 0)),
            pl.BlockSpec((C4, 1), lambda i: (0, 0)),
            pl.BlockSpec((HID, BHW), lambda i: (0, 0)),
        ],
        out_specs=[
            pl.BlockSpec((HID, BHW), lambda i: (0, 0)),
            pl.BlockSpec((HID, BHW), lambda i: (0, 0)),
        ],
        input_output_aliases={4: 1},      # reuse the c_cur buffer for c_next
        compiler_params=pltpu.CompilerParams(
            dimension_semantics=("arbitrary",)),
    )(xh, mask, w_taps, b_all, c_flat)

    h_next = jnp.transpose(h_next.reshape(HID, B, H, W), (1, 0, 2, 3))
    c_next = jnp.transpose(c_next.reshape(HID, B, H, W), (1, 0, 2, 3))
    return h_next, c_next


def _reference_forward(x, h_cur, c_cur, wx, wh, bx, bh):
    """Pure-JAX reference (mirrors the PyTorch forward with defaults)."""
    dn = ('NCHW', 'HWIO', 'NCHW')
    x_conv = lax.conv_general_dilated(
        x, wx, (1, 1), 'SAME', dimension_numbers=dn,
        precision=lax.Precision.HIGHEST) + bx.reshape(1, -1, 1, 1)
    h_conv = lax.conv_general_dilated(
        h_cur, wh, (1, 1), 'SAME', dimension_numbers=dn,
        precision=lax.Precision.HIGHEST) + bh.reshape(1, -1, 1, 1)
    x_i, x_f, x_g, x_o = jnp.split(x_conv, 4, axis=1)
    h_i, h_f, h_g, h_o = jnp.split(h_conv, 4, axis=1)
    f = jax.nn.sigmoid(x_f + h_f)
    i = jax.nn.sigmoid(x_i + h_i)
    g = jnp.tanh(x_g + h_g)
    c_next = f * c_cur + i * g
    o = jax.nn.sigmoid(x_o + h_o)
    h_next = o * jnp.tanh(c_next)
    return h_next, c_next


if __name__ == "__main__":
    # Shapes consistent with ConvLSTMCell(img_width=16, input_dim=4, hidden_dim=8,
    # kernel_size=(3, 3), cnn_dropout=0, rnn_dropout=0).
    B, CIN, H, W = 2, 4, 16, 16
    HID, KH, KW = 8, 3, 3
    C4 = 4 * HID

    key = jax.random.PRNGKey(0)
    ks = jax.random.split(key, 7)
    x = jax.random.normal(ks[0], (B, CIN, H, W), jnp.float32)
    h0 = jax.random.normal(ks[1], (B, HID, H, W), jnp.float32)
    c0 = jax.random.normal(ks[2], (B, HID, H, W), jnp.float32)

    # Deterministic parameter init (PyTorch Conv2d-style uniform bounds).
    bx_bound = 1.0 / (CIN * KH * KW) ** 0.5
    bh_bound = 1.0 / (HID * KH * KW) ** 0.5
    wx = jax.random.uniform(ks[3], (KH, KW, CIN, C4), jnp.float32,
                            -bx_bound, bx_bound)
    wh = jax.random.uniform(ks[4], (KH, KW, HID, C4), jnp.float32,
                            -bh_bound, bh_bound)
    bx = jax.random.uniform(ks[5], (C4,), jnp.float32, -bx_bound, bx_bound)
    bh = jax.random.uniform(ks[6], (C4,), jnp.float32, -bh_bound, bh_bound)

    h_next, c_next = conv_lstm_cell(x, h0, c0, wx, wh, bx, bh)
    jax.block_until_ready((h_next, c_next))

    # Reference with the same bf16 rounding of the conv inputs/weights as the
    # kernel (accumulation, bias and cell state stay f32), so the comparison
    # only sees f32 accumulation-order differences.
    q = lambda a: a.astype(jnp.bfloat16).astype(jnp.float32)
    h_ref, c_ref = _reference_forward(q(x), q(h0), c0, q(wx), q(wh), bx, bh)
    assert jnp.allclose(h_next, h_ref, rtol=2e-3, atol=2e-3), "h_next mismatch"
    assert jnp.allclose(c_next, c_ref, rtol=2e-3, atol=2e-3), "c_next mismatch"

    # Loose sanity check against the full-precision reference (only bf16 input
    # rounding separates them); catches gross tap/mask/shift bugs.
    h_f32, c_f32 = _reference_forward(x, h0, c0, wx, wh, bx, bh)
    assert jnp.allclose(h_next, h_f32, rtol=1e-1, atol=1e-1), "h_next far off"
    assert jnp.allclose(c_next, c_f32, rtol=1e-1, atol=1e-1), "c_next far off"

    print("KERNEL_OK")
</pallas_src>

<mosaic_0001>
module attributes {stable_mosaic.version = 11 : i64} {
  func.func @_convlstm_kernel(%arg0: i32, %arg1: memref<12x546xbf16, #tpu.memory_space<vmem>>, %arg2: memref<9x512xbf16, #tpu.memory_space<vmem>>, %arg3: memref<9x32x12xbf16, #tpu.memory_space<vmem>>, %arg4: memref<32x1xf32, #tpu.memory_space<vmem>>, %arg5: memref<8x512xf32, #tpu.memory_space<vmem>>, %arg6: memref<8x512xf32, #tpu.memory_space<vmem>>, %arg7: memref<8x512xf32, #tpu.memory_space<vmem>>) attributes {dimension_semantics = [#tpu.dimension_semantics<arbitrary>], iteration_bounds = array<i64: 1>, scalar_prefetch = 0 : i64, scratch_operands = 0 : i64, tpu.core_type = #tpu.core_type<tc>, window_params = [{pipeline_mode = #tpu.pipeline_mode<synchronous>, transform_indices = @transform_0, window_bounds = array<i64: 12, 546>}, {pipeline_mode = #tpu.pipeline_mode<synchronous>, transform_indices = @transform_1, window_bounds = array<i64: 9, 512>}, {pipeline_mode = #tpu.pipeline_mode<synchronous>, transform_indices = @transform_2, window_bounds = array<i64: 9, 32, 12>}, {pipeline_mode = #tpu.pipeline_mode<synchronous>, transform_indices = @transform_3, window_bounds = array<i64: 32, 1>}, {pipeline_mode = #tpu.pipeline_mode<synchronous>, transform_indices = @transform_4, window_bounds = array<i64: 8, 512>}, {pipeline_mode = #tpu.pipeline_mode<synchronous>, transform_indices = @transform_5, window_bounds = array<i64: 8, 512>}, {pipeline_mode = #tpu.pipeline_mode<synchronous>, transform_indices = @transform_6, window_bounds = array<i64: 8, 512>}]} {
    %c0 = arith.constant 0 : index
    %c0_0 = arith.constant 0 : index
    %0 = vector.load %arg4[%c0, %c0_0] : memref<32x1xf32, #tpu.memory_space<vmem>>, vector<32x1xf32>
    %1 = vector.shape_cast %0 : vector<32x1xf32> to vector<32x1xf32>
    %2 = vector.broadcast %1 : vector<32x1xf32> to vector<32x512xf32>
    %c0_1 = arith.constant 0 : index
    %c0_2 = arith.constant 0 : index
    %3 = vector.load %arg1[%c0_1, %c0_2] : memref<12x546xbf16, #tpu.memory_space<vmem>>, vector<12x512xbf16>
    %c0_3 = arith.constant 0 : index
    %c0_4 = arith.constant 0 : index
    %4 = vector.load %arg2[%c0_3, %c0_4] : memref<9x512xbf16, #tpu.memory_space<vmem>>, vector<1x512xbf16>
    %c0_5 = arith.constant 0 : index
    %c0_6 = arith.constant 0 : index
    %c0_7 = arith.constant 0 : index
    %5 = vector.load %arg3[%c0_5, %c0_6, %c0_7] : memref<9x32x12xbf16, #tpu.memory_space<vmem>>, vector<1x32x12xbf16>
    %6 = vector.shape_cast %5 : vector<1x32x12xbf16> to vector<32x12xbf16>
    %7 = vector.broadcast %4 : vector<1x512xbf16> to vector<12x512xbf16>
    %8 = arith.mulf %3, %7 : vector<12x512xbf16>
    %cst = arith.constant dense<0.000000e+00> : vector<32x512xf32>
    %9 = tpu.matmul %6, %8, %cst {dimension_numbers = #tpu.dot_dimension_numbers<[1], [0], [0], [1], [0, 0, 1, 1], [], []>} : vector<32x12xbf16>, vector<12x512xbf16>, vector<32x512xf32> -> vector<32x512xf32>
    %10 = arith.addf %2, %9 : vector<32x512xf32>
    %c0_8 = arith.constant 0 : index
    %c1 = arith.constant 1 : index
    %11 = vector.load %arg1[%c0_8, %c1] : memref<12x546xbf16, #tpu.memory_space<vmem>>, vector<12x512xbf16>
    %c1_9 = arith.constant 1 : index
    %c0_10 = arith.constant 0 : index
    %12 = vector.load %arg2[%c1_9, %c0_10] : memref<9x512xbf16, #tpu.memory_space<vmem>>, vector<1x512xbf16>
    %c1_11 = arith.constant 1 : index
    %c0_12 = arith.constant 0 : index
    %c0_13 = arith.constant 0 : index
    %13 = vector.load %arg3[%c1_11, %c0_12, %c0_13] : memref<9x32x12xbf16, #tpu.memory_space<vmem>>, vector<1x32x12xbf16>
    %14 = vector.shape_cast %13 : vector<1x32x12xbf16> to vector<32x12xbf16>
    %15 = vector.broadcast %12 : vector<1x512xbf16> to vector<12x512xbf16>
    %16 = arith.mulf %11, %15 : vector<12x512xbf16>
    %cst_14 = arith.constant dense<0.000000e+00> : vector<32x512xf32>
    %17 = tpu.matmul %14, %16, %cst_14 {dimension_numbers = #tpu.dot_dimension_numbers<[1], [0], [0], [1], [0, 0, 1, 1], [], []>} : vector<32x12xbf16>, vector<12x512xbf16>, vector<32x512xf32> -> vector<32x512xf32>
    %18 = arith.addf %10, %17 : vector<32x512xf32>
    %c0_15 = arith.constant 0 : index
    %c2 = arith.constant 2 : index
    %19 = vector.load %arg1[%c0_15, %c2] : memref<12x546xbf16, #tpu.memory_space<vmem>>, vector<12x512xbf16>
    %c2_16 = arith.constant 2 : index
    %c0_17 = arith.constant 0 : index
    %20 = vector.load %arg2[%c2_16, %c0_17] : memref<9x512xbf16, #tpu.memory_space<vmem>>, vector<1x512xbf16>
    %c2_18 = arith.constant 2 : index
    %c0_19 = arith.constant 0 : index
    %c0_20 = arith.constant 0 : index
    %21 = vector.load %arg3[%c2_18, %c0_19, %c0_20] : memref<9x32x12xbf16, #tpu.memory_space<vmem>>, vector<1x32x12xbf16>
    %22 = vector.shape_cast %21 : vector<1x32x12xbf16> to vector<32x12xbf16>
    %23 = vector.broadcast %20 : vector<1x512xbf16> to vector<12x512xbf16>
    %24 = arith.mulf %19, %23 : vector<12x512xbf16>
    %cst_21 = arith.constant dense<0.000000e+00> : vector<32x512xf32>
    %25 = tpu.matmul %22, %24, %cst_21 {dimension_numbers = #tpu.dot_dimension_numbers<[1], [0], [0], [1], [0, 0, 1, 1], [], []>} : vector<32x12xbf16>, vector<12x512xbf16>, vector<32x512xf32> -> vector<32x512xf32>
    %26 = arith.addf %18, %25 : vector<32x512xf32>
    %c0_22 = arith.constant 0 : index
    %c16 = arith.constant 16 : index
    %27 = vector.load %arg1[%c0_22, %c16] : memref<12x546xbf16, #tpu.memory_space<vmem>>, vector<12x512xbf16>
    %c3 = arith.constant 3 : index
    %c0_23 = arith.constant 0 : index
    %28 = vector.load %arg2[%c3, %c0_23] : memref<9x512xbf16, #tpu.memory_space<vmem>>, vector<1x512xbf16>
    %c3_24 = arith.constant 3 : index
    %c0_25 = arith.constant 0 : index
    %c0_26 = arith.constant 0 : index
    %29 = vector.load %arg3[%c3_24, %c0_25, %c0_26] : memref<9x32x12xbf16, #tpu.memory_space<vmem>>, vector<1x32x12xbf16>
    %30 = vector.shape_cast %29 : vector<1x32x12xbf16> to vector<32x12xbf16>
    %31 = vector.broadcast %28 : vector<1x512xbf16> to vector<12x512xbf16>
    %32 = arith.mulf %27, %31 : vector<12x512xbf16>
    %cst_27 = arith.constant dense<0.000000e+00> : vector<32x512xf32>
    %33 = tpu.matmul %30, %32, %cst_27 {dimension_numbers = #tpu.dot_dimension_numbers<[1], [0], [0], [1], [0, 0, 1, 1], [], []>} : vector<32x12xbf16>, vector<12x512xbf16>, vector<32x512xf32> -> vector<32x512xf32>
    %34 = arith.addf %26, %33 : vector<32x512xf32>
    %c0_28 = arith.constant 0 : index
    %c17 = arith.constant 17 : index
    %35 = vector.load %arg1[%c0_28, %c17] : memref<12x546xbf16, #tpu.memory_space<vmem>>, vector<12x512xbf16>
    %c4 = arith.constant 4 : index
    %c0_29 = arith.constant 0 : index
    %36 = vector.load %arg2[%c4, %c0_29] : memref<9x512xbf16, #tpu.memory_space<vmem>>, vector<1x512xbf16>
    %c4_30 = arith.constant 4 : index
    %c0_31 = arith.constant 0 : index
    %c0_32 = arith.constant 0 : index
    %37 = vector.load %arg3[%c4_30, %c0_31, %c0_32] : memref<9x32x12xbf16, #tpu.memory_space<vmem>>, vector<1x32x12xbf16>
    %38 = vector.shape_cast %37 : vector<1x32x12xbf16> to vector<32x12xbf16>
    %39 = vector.broadcast %36 : vector<1x512xbf16> to vector<12x512xbf16>
    %40 = arith.mulf %35, %39 : vector<12x512xbf16>
    %cst_33 = arith.constant dense<0.000000e+00> : vector<32x512xf32>
    %41 = tpu.matmul %38, %40, %cst_33 {dimension_numbers = #tpu.dot_dimension_numbers<[1], [0], [0], [1], [0, 0, 1, 1], [], []>} : vector<32x12xbf16>, vector<12x512xbf16>, vector<32x512xf32> -> vector<32x512xf32>
    %42 = arith.addf %34, %41 : vector<32x512xf32>
    %c0_34 = arith.constant 0 : index
    %c18 = arith.constant 18 : index
    %43 = vector.load %arg1[%c0_34, %c18] : memref<12x546xbf16, #tpu.memory_space<vmem>>, vector<12x512xbf16>
    %c5 = arith.constant 5 : index
    %c0_35 = arith.constant 0 : index
    %44 = vector.load %arg2[%c5, %c0_35] : memref<9x512xbf16, #tpu.memory_space<vmem>>, vector<1x512xbf16>
    %c5_36 = arith.constant 5 : index
    %c0_37 = arith.constant 0 : index
    %c0_38 = arith.constant 0 : index
    %45 = vector.load %arg3[%c5_36, %c0_37, %c0_38] : memref<9x32x12xbf16, #tpu.memory_space<vmem>>, vector<1x32x12xbf16>
    %46 = vector.shape_cast %45 : vector<1x32x12xbf16> to vector<32x12xbf16>
    %47 = vector.broadcast %44 : vector<1x512xbf16> to vector<12x512xbf16>
    %48 = arith.mulf %43, %47 : vector<12x512xbf16>
    %cst_39 = arith.constant dense<0.000000e+00> : vector<32x512xf32>
    %49 = tpu.matmul %46, %48, %cst_39 {dimension_numbers = #tpu.dot_dimension_numbers<[1], [0], [0], [1], [0, 0, 1, 1], [], []>} : vector<32x12xbf16>, vector<12x512xbf16>, vector<32x512xf32> -> vector<32x512xf32>
    %50 = arith.addf %42, %49 : vector<32x512xf32>
    %c0_40 = arith.constant 0 : index
    %c32 = arith.constant 32 : index
    %51 = vector.load %arg1[%c0_40, %c32] : memref<12x546xbf16, #tpu.memory_space<vmem>>, vector<12x512xbf16>
    %c6 = arith.constant 6 : index
    %c0_41 = arith.constant 0 : index
    %52 = vector.load %arg2[%c6, %c0_41] : memref<9x512xbf16, #tpu.memory_space<vmem>>, vector<1x512xbf16>
    %c6_42 = arith.constant 6 : index
    %c0_43 = arith.constant 0 : index
    %c0_44 = arith.constant 0 : index
    %53 = vector.load %arg3[%c6_42, %c0_43, %c0_44] : memref<9x32x12xbf16, #tpu.memory_space<vmem>>, vector<1x32x12xbf16>
    %54 = vector.shape_cast %53 : vector<1x32x12xbf16> to vector<32x12xbf16>
    %55 = vector.broadcast %52 : vector<1x512xbf16> to vector<12x512xbf16>
    %56 = arith.mulf %51, %55 : vector<12x512xbf16>
    %cst_45 = arith.constant dense<0.000000e+00> : vector<32x512xf32>
    %57 = tpu.matmul %54, %56, %cst_45 {dimension_numbers = #tpu.dot_dimension_numbers<[1], [0], [0], [1], [0, 0, 1, 1], [], []>} : vector<32x12xbf16>, vector<12x512xbf16>, vector<32x512xf32> -> vector<32x512xf32>
    %58 = arith.addf %50, %57 : vector<32x512xf32>
    %c0_46 = arith.constant 0 : index
    %c33 = arith.constant 33 : index
    %59 = vector.load %arg1[%c0_46, %c33] : memref<12x546xbf16, #tpu.memory_space<vmem>>, vector<12x512xbf16>
    %c7 = arith.constant 7 : index
    %c0_47 = arith.constant 0 : index
    %60 = vector.load %arg2[%c7, %c0_47] : memref<9x512xbf16, #tpu.memory_space<vmem>>, vector<1x512xbf16>
    %c7_48 = arith.constant 7 : index
    %c0_49 = arith.constant 0 : index
    %c0_50 = arith.constant 0 : index
    %61 = vector.load %arg3[%c7_48, %c0_49, %c0_50] : memref<9x32x12xbf16, #tpu.memory_space<vmem>>, vector<1x32x12xbf16>
    %62 = vector.shape_cast %61 : vector<1x32x12xbf16> to vector<32x12xbf16>
    %63 = vector.broadcast %60 : vector<1x512xbf16> to vector<12x512xbf16>
    %64 = arith.mulf %59, %63 : vector<12x512xbf16>
    %cst_51 = arith.constant dense<0.000000e+00> : vector<32x512xf32>
    %65 = tpu.matmul %62, %64, %cst_51 {dimension_numbers = #tpu.dot_dimension_numbers<[1], [0], [0], [1], [0, 0, 1, 1], [], []>} : vector<32x12xbf16>, vector<12x512xbf16>, vector<32x512xf32> -> vector<32x512xf32>
    %66 = arith.addf %58, %65 : vector<32x512xf32>
    %c0_52 = arith.constant 0 : index
    %c34 = arith.constant 34 : index
    %67 = vector.load %arg1[%c0_52, %c34] : memref<12x546xbf16, #tpu.memory_space<vmem>>, vector<12x512xbf16>
    %c8 = arith.constant 8 : index
    %c0_53 = arith.constant 0 : index
    %68 = vector.load %arg2[%c8, %c0_53] : memref<9x512xbf16, #tpu.memory_space<vmem>>, vector<1x512xbf16>
    %c8_54 = arith.constant 8 : index
    %c0_55 = arith.constant 0 : index
    %c0_56 = arith.constant 0 : index
    %69 = vector.load %arg3[%c8_54, %c0_55, %c0_56] : memref<9x32x12xbf16, #tpu.memory_space<vmem>>, vector<1x32x12xbf16>
    %70 = vector.shape_cast %69 : vector<1x32x12xbf16> to vector<32x12xbf16>
    %71 = vector.broadcast %68 : vector<1x512xbf16> to vector<12x512xbf16>
    %72 = arith.mulf %67, %71 : vector<12x512xbf16>
    %cst_57 = arith.constant dense<0.000000e+00> : vector<32x512xf32>
    %73 = tpu.matmul %70, %72, %cst_57 {dimension_numbers = #tpu.dot_dimension_numbers<[1], [0], [0], [1], [0, 0, 1, 1], [], []>} : vector<32x12xbf16>, vector<12x512xbf16>, vector<32x512xf32> -> vector<32x512xf32>
    %74 = arith.addf %66, %73 : vector<32x512xf32>
    %75 = vector.extract_strided_slice %74 {offsets = [0, 0], sizes = [8, 512], strides = [1, 1]} : vector<32x512xf32> to vector<8x512xf32>
    %76 = arith.negf %75 : vector<8x512xf32>
    %77 = math.exp %76 : vector<8x512xf32>
    %cst_58 = arith.constant 1.000000e+00 : f32
    %78 = vector.broadcast %cst_58 : f32 to vector<8x512xf32>
    %79 = arith.addf %78, %77 : vector<8x512xf32>
    %80 = arith.divf %78, %79 : vector<8x512xf32>
    %81 = vector.extract_strided_slice %74 {offsets = [8, 0], sizes = [8, 512], strides = [1, 1]} : vector<32x512xf32> to vector<8x512xf32>
    %82 = arith.negf %81 : vector<8x512xf32>
    %83 = math.exp %82 : vector<8x512xf32>
    %cst_59 = arith.constant 1.000000e+00 : f32
    %84 = vector.broadcast %cst_59 : f32 to vector<8x512xf32>
    %85 = arith.addf %84, %83 : vector<8x512xf32>
    %86 = arith.divf %84, %85 : vector<8x512xf32>
    %87 = vector.extract_strided_slice %74 {offsets = [16, 0], sizes = [8, 512], strides = [1, 1]} : vector<32x512xf32> to vector<8x512xf32>
    %88 = math.tanh %87 : vector<8x512xf32>
    %89 = vector.extract_strided_slice %74 {offsets = [24, 0], sizes = [8, 512], strides = [1, 1]} : vector<32x512xf32> to vector<8x512xf32>
    %90 = arith.negf %89 : vector<8x512xf32>
    %91 = math.exp %90 : vector<8x512xf32>
    %cst_60 = arith.constant 1.000000e+00 : f32
    %92 = vector.broadcast %cst_60 : f32 to vector<8x512xf32>
    %93 = arith.addf %92, %91 : vector<8x512xf32>
    %94 = arith.divf %92, %93 : vector<8x512xf32>
    %c0_61 = arith.constant 0 : index
    %c0_62 = arith.constant 0 : index
    %95 = vector.load %arg5[%c0_61, %c0_62] : memref<8x512xf32, #tpu.memory_space<vmem>>, vector<8x512xf32>
    %96 = arith.mulf %86, %95 : vector<8x512xf32>
    %97 = arith.mulf %80, %88 : vector<8x512xf32>
    %98 = arith.addf %96, %97 : vector<8x512xf32>
    %99 = math.tanh %98 : vector<8x512xf32>
    %100 = arith.mulf %94, %99 : vector<8x512xf32>
    %c0_63 = arith.constant 0 : index
    %c0_64 = arith.constant 0 : index
    %101 = vector.load %arg6[%c0_63, %c0_64] : memref<8x512xf32, #tpu.memory_space<vmem>>, vector<8x512xf32>
    tpu.vector_store %arg6[%c0_63, %c0_64], %100 {strides = array<i32>} : memref<8x512xf32, #tpu.memory_space<vmem>>, vector<8x512xf32>,
    %c0_65 = arith.constant 0 : index
    %c0_66 = arith.constant 0 : index
    %102 = vector.load %arg7[%c0_65, %c0_66] : memref<8x512xf32, #tpu.memory_space<vmem>>, vector<8x512xf32>
    tpu.vector_store %arg7[%c0_65, %c0_66], %98 {strides = array<i32>} : memref<8x512xf32, #tpu.memory_space<vmem>>, vector<8x512xf32>,
    return
  }
  func.func @transform_0(%arg0: i32) -> (i32, i32) {
    %c0_i32 = arith.constant 0 : i32
    %c0_i32_0 = arith.constant 0 : i32
    %c0_i32_1 = arith.constant 0 : i32
    return %c0_i32, %c0_i32_0 : i32, i32
  }
  func.func @transform_1(%arg0: i32) -> (i32, i32) {
    %c0_i32 = arith.constant 0 : i32
    %c0_i32_0 = arith.constant 0 : i32
    %c0_i32_1 = arith.constant 0 : i32
    return %c0_i32, %c0_i32_0 : i32, i32
  }
  func.func @transform_2(%arg0: i32) -> (i32, i32, i32) {
    %c0_i32 = arith.constant 0 : i32
    %c0_i32_0 = arith.constant 0 : i32
    %c0_i32_1 = arith.constant 0 : i32
    %c0_i32_2 = arith.constant 0 : i32
    return %c0_i32, %c0_i32_0, %c0_i32_1 : i32, i32, i32
  }
  func.func @transform_3(%arg0: i32) -> (i32, i32) {
    %c0_i32 = arith.constant 0 : i32
    %c0_i32_0 = arith.constant 0 : i32
    %c0_i32_1 = arith.constant 0 : i32
    return %c0_i32, %c0_i32_0 : i32, i32
  }
  func.func @transform_4(%arg0: i32) -> (i32, i32) {
    %c0_i32 = arith.constant 0 : i32
    %c0_i32_0 = arith.constant 0 : i32
    %c0_i32_1 = arith.constant 0 : i32
    return %c0_i32, %c0_i32_0 : i32, i32
  }
  func.func @transform_5(%arg0: i32) -> (i32, i32) {
    %c0_i32 = arith.constant 0 : i32
    %c0_i32_0 = arith.constant 0 : i32
    %c0_i32_1 = arith.constant 0 : i32
    return %c0_i32, %c0_i32_0 : i32, i32
  }
  func.func @transform_6(%arg0: i32) -> (i32, i32) {
    %c0_i32 = arith.constant 0 : i32
    %c0_i32_0 = arith.constant 0 : i32
    %c0_i32_1 = arith.constant 0 : i32
    return %c0_i32, %c0_i32_0 : i32, i32
  }
}

</mosaic_0001>

<llo_original>
// kernel: conv_lstm_cell.1
$region0: #{conv_lstm_cell.1}
  #allocation0 [shape = 'u32[]', space=smem, size = 0x4, offset = 0x4, fixed_abs, tag = 'smem constant byte address 0x4 - core index']
  #allocation1 [shape = 'u32[144,128]{1,0:T(1,128)}', space=vmem, size = 0x12000, scoped, tag = 'internal scratch']
  %s0 = inlined_call_operand.vmem [shape: bf16[12,546], index: 0, kind: input, shape index: {}]
  %s1 = inlined_call_operand.vmem [shape: bf16[9,512], index: 1, kind: input, shape index: {}]
  %s2 = inlined_call_operand.vmem [shape: bf16[9,32,12], index: 2, kind: input, shape index: {}]
  %s3 = inlined_call_operand.vmem [shape: f32[32,1], index: 3, kind: input, shape index: {}]
  %s4 = inlined_call_operand.vmem [shape: f32[8,512], index: 4, kind: input, shape index: {}, may-alias: {4,6}]
  %s5 = inlined_call_operand.vmem [shape: f32[8,512], index: 5, kind: output, shape index: {0}]
  %s6 = inlined_call_operand.vmem [shape: f32[8,512], index: 6, kind: output, shape index: {1}, may-alias: {4,6}]
  %7 = xla_tuple %s5, %s6
  %s8 = sld [smem:[#allocation0]]
  $region38: #{conv_lstm_cell.1} parent=0
    _
  %s10 = ssub.s32 1, %s8
  %s11 = scalar_select 0, %s10, %s8
  // Predicated region
  $region2: #{conv_lstm_cell.1} parent=0 // pred_check
    _
  $region3: #{conv_lstm_cell.1} parent=0 // pred_check_branch
    %13 = sbr.rel (0) target = $region5
  $region4: #{conv_lstm_cell.1} parent=0 // pred_region
    _
  $region5: #{conv_lstm_cell.1} parent=0 // pred_fallthru
    _
  // Predicated region
  $region6: #{conv_lstm_cell.1} parent=0 // pred_check
    _
  $region7: #{conv_lstm_cell.1} parent=0 // pred_check_branch
    %15 = sbr.rel (0) target = $region9
  $region8: #{conv_lstm_cell.1} parent=0 // pred_region
    _
  $region9: #{conv_lstm_cell.1} parent=0 // pred_fallthru
    _
  // Predicated region
  $region10: #{conv_lstm_cell.1} parent=0 // pred_check
    _
  $region11: #{conv_lstm_cell.1} parent=0 // pred_check_branch
    %17 = sbr.rel (0) target = $region13
  $region12: #{conv_lstm_cell.1} parent=0 // pred_region
    _
  $region13: #{conv_lstm_cell.1} parent=0 // pred_fallthru
    _
  // Predicated region
  $region14: #{conv_lstm_cell.1} parent=0 // pred_check
    _
  $region15: #{conv_lstm_cell.1} parent=0 // pred_check_branch
    %19 = sbr.rel (0) target = $region17
  $region16: #{conv_lstm_cell.1} parent=0 // pred_region
    _
  $region17: #{conv_lstm_cell.1} parent=0 // pred_fallthru
    _
  // Predicated region
  $region18: #{conv_lstm_cell.1} parent=0 // pred_check
    _
  $region19: #{conv_lstm_cell.1} parent=0 // pred_check_branch
    %21 = sbr.rel (0) target = $region21
  $region20: #{conv_lstm_cell.1} parent=0 // pred_region
    _
  $region21: #{conv_lstm_cell.1} parent=0 // pred_fallthru
    _
  %v23 = vld [vmem:[%s3] sm:$0xff]
  %v24 = vld [vmem:[%s3 + $0x8] sm:$0xff]
  %v25 = vld [vmem:[%s3 + $0x10] sm:$0xff]
  %v26 = vld [vmem:[%s3 + $0x18] sm:$0xff]
  %28 = vset.pattern.permute.xlu0 0
  %29 = vperm.xlu0 %28, %v23
  %v30 = vpop.permute.xlu0 %29
  %33 = vset.pattern.permute.xlu0 0
  %34 = vperm.xlu0 %33, %v24
  %v35 = vpop.permute.xlu0 %34
  %38 = vset.pattern.permute.xlu0 0
  %39 = vperm.xlu0 %38, %v25
  %v40 = vpop.permute.xlu0 %39
  %43 = vset.pattern.permute.xlu0 0
  %44 = vperm.xlu0 %43, %v26
  %v45 = vpop.permute.xlu0 %44
  %v47 = vld [vmem:[%s0] sm:$0xff]
  %v48 = vld [vmem:[%s0 + $0x8] sm:$0xff]
  %v49 = vld [vmem:[%s0 + $0x14] sm:$0x33]
  %v50 = vld [vmem:[%s0 + $0x1c] sm:$0x33]
  %v51 = vld [vmem:[%s1] sm:$0x11]
  %v52 = vld [vmem:[%s1 + $0x8] sm:$0x11]
  %v53 = vld [vmem:[%s2] sm:$0xf]
  %v54 = vld [vmem:[%s2 + $0x4] sm:$0xf]
  %v55 = vld [vmem:[%s2 + $0x8] sm:$0xf]
  %v56 = vld [vmem:[%s2 + $0xc] sm:$0xf]
  %v59 = vunpack.c.l.b16 %v51
  %v60 = vunpack.c.h.b16 %v51
  %v61 = vunpack.c.l.b16 %v52
  %v62 = vunpack.c.h.b16 %v52
  %v63 = vpack.c.b16 %v59, %v59
  %v64 = vpack.c.b16 %v60, %v60
  %v65 = vpack.c.b16 %v61, %v61
  %v66 = vpack.c.b16 %v62, %v62
  %v68 = vpack.i.b16 %v63, %v63
  %v70 = vlaneseq
  %v71 = vshrl.u32 %v70, 7
  %v72 = vsub.s32 0, %v71
  %v73 = vrot.slane %v68, %v72
  %v75 = vpack.i.b16 %v64, %v64
  %v77 = vlaneseq
  %v78 = vshrl.u32 %v77, 7
  %v79 = vsub.s32 0, %v78
  %v80 = vrot.slane %v75, %v79
  %v82 = vpack.i.b16 %v65, %v65
  %v84 = vlaneseq
  %v85 = vshrl.u32 %v84, 7
  %v86 = vsub.s32 0, %v85
  %v87 = vrot.slane %v82, %v86
  %v89 = vpack.i.b16 %v66, %v66
  %v91 = vlaneseq
  %v92 = vshrl.u32 %v91, 7
  %v93 = vsub.s32 0, %v92
  %v94 = vrot.slane %v89, %v93
  %v99 = vunpack.c.l.b16 %v73
  %v100 = vunpack.c.l.b16 %v80
  %v101 = vunpack.c.l.b16 %v87
  %v102 = vunpack.c.l.b16 %v94
  %v103 = vpack.c.b16 %v100, %v99
  %v104 = vpack.c.b16 %v102, %v101
  %v107 = vmul.bf16 %v47, %v103
  %v108 = vmul.bf16 %v48, %v104
  %v109 = vmul.bf16 %v49, %v103
  %v110 = vmul.bf16 %v50, %v104
  %v115 = vunpack.c.l.b16 %v53
  %v116 = vunpack.c.l.b16 %v54
  %v117 = vunpack.c.l.b16 %v55
  %v118 = vunpack.c.l.b16 %v56
  %v119 = vpack.c.b16 %v116, %v115
  %v120 = vpack.c.b16 %v118, %v117
  %v125 = vunpack.c.l.b16 %v107
  %v126 = vunpack.c.h.b16 %v107
  %v127 = vunpack.c.l.b16 %v108
  %v128 = vunpack.c.h.b16 %v108
  %v129 = vunpack.c.l.b16 %v109
  %v130 = vunpack.c.h.b16 %v109
  %v131 = vunpack.c.l.b16 %v110
  %v132 = vunpack.c.h.b16 %v110
  %v133 = vpack.c.b16 %v129, %v125
  %v134 = vpack.c.b16 %v130, %v126
  %v135 = vpack.c.b16 %v131, %v127
  %v136 = vpack.c.b16 %v132, %v128
  %vm137 = vcmask 97280
  %v139 = vsel %vm137, %v119, 0
  %v142 = vsel %vm137, %v120, 0
  %vm144 = vcmask 1045504
  %v146 = vsel %vm144, %v133, 0
  %v149 = vsel %vm144, %v134, 0
  %v152 = vsel %vm144, %v135, 0
  %v155 = vsel %vm144, %v136, 0
  %157 = vmatprep.subr.bf16.mxu0 0
  %158 = vmatpush1.bf16.msra.mxu0 0
  %159 = vmatprep.subr.bf16.mxu0 0
  %160 = vmatpush1.bf16.msra.mxu0 0
  %161 = vmatprep.subr.bf16.mxu0 0
  %162 = vmatpush1.bf16.msra.mxu0 0
  %163 = vmatprep.subr.bf16.mxu0 0
  %164 = vmatpush1.bf16.msra.mxu0 0
  %165 = vmatprep.subr.bf16.mxu0 0
  %166 = vmatpush1.bf16.msra.mxu0 0
  %167 = vmatprep.subr.bf16.mxu0 0
  %168 = vmatpush1.bf16.msra.mxu0 0
  %169 = vmatprep.subr.bf16.mxu0 0
  %170 = vmatpush1.bf16.msra.mxu0 0
  %171 = vmatprep.subr.bf16.mxu0 %v149
  %172 = vmatpush1.bf16.msra.mxu0 %v146
  %173 = vmatprep.subr.bf16.mxu0 0
  %174 = vmatpush2.bf16.msra.mxu0 0
  %175 = vmatprep.subr.bf16.mxu0 0
  %176 = vmatpush2.bf16.msra.mxu0 0
  %177 = vmatprep.subr.bf16.mxu0 0
  %178 = vmatpush2.bf16.msra.mxu0 0
  %179 = vmatprep.subr.bf16.mxu0 0
  %180 = vmatpush2.bf16.msra.mxu0 0
  %181 = vmatprep.subr.bf16.mxu0 0
  %182 = vmatpush2.bf16.msra.mxu0 0
  %183 = vmatprep.subr.bf16.mxu0 0
  %184 = vmatpush2.bf16.msra.mxu0 0
  %185 = vmatprep.subr.bf16.mxu0 0
  %186 = vmatpush2.bf16.msra.mxu0 0
  %187 = vmatprep.subr.bf16.mxu0 0
  %188 = vmatpush2.bf16.msra.mxu0 0
  %189 = vmatprep.mubr.bf16.mxu0 0
  %190 = vmatmul.mubr.bf16.gmra.mxu0 %v139
  %v191 = vpop.f32.mrf.mxu0
  %v192 = vadd.f32 0.0, %v191
  %v193 = vpop.f32.mrf.mxu0
  %v194 = vadd.f32 0.0, %v193
  %v195 = vpop.f32.mrf.mxu0
  %v196 = vadd.f32 0.0, %v195
  %v197 = vpop.f32.mrf.mxu0
  %v198 = vadd.f32 0.0, %v197
  %199 = vmatprep.mubr.bf16.mxu0 0
  %200 = vmatmul.mubr.bf16.gmra.mxu0 %v142
  %v201 = vpop.f32.mrf.mxu0
  %v202 = vadd.f32 0.0, %v201
  %v203 = vpop.f32.mrf.mxu0
  %v204 = vadd.f32 0.0, %v203
  %v205 = vpop.f32.mrf.mxu0
  %v206 = vadd.f32 0.0, %v205
  %v207 = vpop.f32.mrf.mxu0
  %v208 = vadd.f32 0.0, %v207
  %209 = vdwg.mxu0
  %210 = vmatprep.subr.bf16.mxu0 0
  %211 = vmatpush1.bf16.msra.mxu0 0
  %212 = vmatprep.subr.bf16.mxu0 0
  %213 = vmatpush1.bf16.msra.mxu0 0
  %214 = vmatprep.subr.bf16.mxu0 0
  %215 = vmatpush1.bf16.msra.mxu0 0
  %216 = vmatprep.subr.bf16.mxu0 0
  %217 = vmatpush1.bf16.msra.mxu0 0
  %218 = vmatprep.subr.bf16.mxu0 0
  %219 = vmatpush1.bf16.msra.mxu0 0
  %220 = vmatprep.subr.bf16.mxu0 0
  %221 = vmatpush1.bf16.msra.mxu0 0
  %222 = vmatprep.subr.bf16.mxu0 0
  %223 = vmatpush1.bf16.msra.mxu0 0
  %224 = vmatprep.subr.bf16.mxu0 %v155
  %225 = vmatpush1.bf16.msra.mxu0 %v152
  %226 = vmatprep.subr.bf16.mxu0 0
  %227 = vmatpush2.bf16.msra.mxu0 0
  %228 = vmatprep.subr.bf16.mxu0 0
  %229 = vmatpush2.bf16.msra.mxu0 0
  %230 = vmatprep.subr.bf16.mxu0 0
  %231 = vmatpush2.bf16.msra.mxu0 0
  %232 = vmatprep.subr.bf16.mxu0 0
  %233 = vmatpush2.bf16.msra.mxu0 0
  %234 = vmatprep.subr.bf16.mxu0 0
  %235 = vmatpush2.bf16.msra.mxu0 0
  %236 = vmatprep.subr.bf16.mxu0 0
  %237 = vmatpush2.bf16.msra.mxu0 0
  %238 = vmatprep.subr.bf16.mxu0 0
  %239 = vmatpush2.bf16.msra.mxu0 0
  %240 = vmatprep.subr.bf16.mxu0 0
  %241 = vmatpush2.bf16.msra.mxu0 0
  %242 = vmatprep.mubr.bf16.mxu0 0
  %243 = vmatmul.mubr.bf16.gmra.mxu0 %v139
  %v244 = vpop.f32.mrf.mxu0
  %v245 = vadd.f32 0.0, %v244
  %v246 = vpop.f32.mrf.mxu0
  %v247 = vadd.f32 0.0, %v246
  %v248 = vpop.f32.mrf.mxu0
  %v249 = vadd.f32 0.0, %v248
  %v250 = vpop.f32.mrf.mxu0
  %v251 = vadd.f32 0.0, %v250
  %252 = vmatprep.mubr.bf16.mxu0 0
  %253 = vmatmul.mubr.bf16.gmra.mxu0 %v142
  %v254 = vpop.f32.mrf.mxu0
  %v255 = vadd.f32 0.0, %v254
  %v256 = vpop.f32.mrf.mxu0
  %v257 = vadd.f32 0.0, %v256
  %v258 = vpop.f32.mrf.mxu0
  %v259 = vadd.f32 0.0, %v258
  %v260 = vpop.f32.mrf.mxu0
  %v261 = vadd.f32 0.0, %v260
  %262 = vdwg.mxu0
  %v263 = vadd.f32 %v30, %v192
  %v264 = vadd.f32 %v30, %v194
  %v265 = vadd.f32 %v30, %v245
  %v266 = vadd.f32 %v30, %v247
  %v267 = vadd.f32 %v35, %v196
  %v268 = vadd.f32 %v35, %v198
  %v269 = vadd.f32 %v35, %v249
  %v270 = vadd.f32 %v35, %v251
  %v271 = vadd.f32 %v40, %v202
  %v272 = vadd.f32 %v40, %v204
  %v273 = vadd.f32 %v40, %v255
  %v274 = vadd.f32 %v40, %v257
  %v275 = vadd.f32 %v45, %v206
  %v276 = vadd.f32 %v45, %v208
  %v277 = vadd.f32 %v45, %v259
  %v278 = vadd.f32 %v45, %v261
  %v279 = vld [vmem:[%s0] sm:$0xff]
  %v280 = vld [vmem:[%s0 + $0x8] sm:$0xff]
  %v281 = vld [vmem:[%s0 + $0x10] sm:$0xf]
  %v282 = vld [vmem:[%s0 + $0x14] sm:$0x33]
  %v283 = vld [vmem:[%s0 + $0x1c] sm:$0x33]
  %v284 = vld [vmem:[%s0 + $0x24] sm:$0x3]
  %s285 = scalar_lea.vmem %s2, 16
  %v286 = vld [vmem:[%s285] sm:$0xf]
  %v287 = vld [vmem:[%s285 + $0x4] sm:$0xf]
  %v288 = vld [vmem:[%s285 + $0x8] sm:$0xf]
  %v289 = vld [vmem:[%s285 + $0xc] sm:$0xf]
  %v290 = vshrl.u32 %v63, 16
  %v291 = vpack.i.b16 %v290, %v290
  %v293 = vlaneseq
  %v294 = vshrl.u32 %v293, 7
  %v295 = vsub.s32 0, %v294
  %v296 = vrot.slane %v291, %v295
  %v297 = vshrl.u32 %v64, 16
  %v298 = vpack.i.b16 %v297, %v297
  %v300 = vlaneseq
  %v301 = vshrl.u32 %v300, 7
  %v302 = vsub.s32 0, %v301
  %v303 = vrot.slane %v298, %v302
  %v304 = vshrl.u32 %v65, 16
  %v305 = vpack.i.b16 %v304, %v304
  %v307 = vlaneseq
  %v308 = vshrl.u32 %v307, 7
  %v309 = vsub.s32 0, %v308
  %v310 = vrot.slane %v305, %v309
  %v311 = vshrl.u32 %v66, 16
  %v312 = vpack.i.b16 %v311, %v311
  %v314 = vlaneseq
  %v315 = vshrl.u32 %v314, 7
  %v316 = vsub.s32 0, %v315
  %v317 = vrot.slane %v312, %v316
  %v322 = vunpack.c.l.b16 %v296
  %v323 = vunpack.c.l.b16 %v303
  %v324 = vunpack.c.l.b16 %v310
  %v325 = vunpack.c.l.b16 %v317
  %v326 = vpack.c.b16 %v323, %v322
  %v327 = vpack.c.b16 %v325, %v324
  %328 = vrot.lane.b32.xlu0 %v326, 1
  %v329 = vpop.permute.xlu0 %328
  %330 = vrot.lane.b32.xlu0 %v327, 1
  %v331 = vpop.permute.xlu0 %330
  %v332 = vrot.slane %v329, 4
  %v333 = vrot.slane %v331, 4
  %vm334 = vcmask 7168
  %v335 = vsel %vm334, %v332, %v329
  %vm336 = vcmask 1043456
  %v337 = vsel %vm336, %v332, %v333
  %v338 = vsel %vm334, %v337, %v331
  %v342 = vmul.bf16 %v279, %v335
  %v343 = vmul.bf16 %v280, %v338
  %v344 = vmul.bf16 %v281, %v333
  %v345 = vmul.bf16 %v282, %v335
  %v346 = vmul.bf16 %v283, %v338
  %v347 = vmul.bf16 %v284, %v333
  %v352 = vunpack.c.l.b16 %v286
  %v353 = vunpack.c.l.b16 %v287
  %v354 = vunpack.c.l.b16 %v288
  %v355 = vunpack.c.l.b16 %v289
  %v356 = vpack.c.b16 %v353, %v352
  %v357 = vpack.c.b16 %v355, %v354
  %v364 = vunpack.c.l.b16 %v342
  %v365 = vunpack.c.h.b16 %v342
  %v366 = vunpack.c.l.b16 %v343
  %v367 = vunpack.c.h.b16 %v343
  %v368 = vunpack.c.l.b16 %v344
  %v369 = vunpack.c.l.b16 %v345
  %v370 = vunpack.c.h.b16 %v345
  %v371 = vunpack.c.l.b16 %v346
  %v372 = vunpack.c.h.b16 %v346
  %v373 = vunpack.c.l.b16 %v347
  %v374 = vpack.c.b16 %v369, %v364
  %v375 = vpack.c.b16 %v370, %v365
  %v376 = vpack.c.b16 %v371, %v366
  %v377 = vpack.c.b16 %v372, %v367
  %v378 = vpack.c.b16 %v373, %v368
  %379 = vrot.lane.b32.xlu0 %v374, 127
  %v380 = vpop.permute.xlu0 %379
  %381 = vrot.lane.b32.xlu0 %v375, 127
  %v382 = vpop.permute.xlu0 %381
  %383 = vrot.lane.b32.xlu0 %v376, 127
  %v384 = vpop.permute.xlu0 %383
  %385 = vrot.lane.b32.xlu0 %v377, 127
  %v386 = vpop.permute.xlu0 %385
  %387 = vrot.lane.b32.xlu0 %v378, 127
  %v388 = vpop.permute.xlu0 %387
  %vm389 = vcmask 1039360
  %v390 = vsel %vm389, %v380, %v382
  %v391 = vsel %vm389, %v382, %v384
  %v392 = vsel %vm389, %v384, %v386
  %v393 = vsel %vm389, %v386, %v388
  %v395 = vsel %vm137, %v356, 0
  %v398 = vsel %vm137, %v357, 0
  %v401 = vsel %vm144, %v390, 0
  %v404 = vsel %vm144, %v391, 0
  %v407 = vsel %vm144, %v392, 0
  %v410 = vsel %vm144, %v393, 0
  %412 = vmatprep.subr.bf16.mxu0 0
  %413 = vmatpush1.bf16.msra.mxu0 0
  %414 = vmatprep.subr.bf16.mxu0 0
  %415 = vmatpush1.bf16.msra.mxu0 0
  %416 = vmatprep.subr.bf16.mxu0 0
  %417 = vmatpush1.bf16.msra.mxu0 0
  %418 = vmatprep.subr.bf16.mxu0 0
  %419 = vmatpush1.bf16.msra.mxu0 0
  %420 = vmatprep.subr.bf16.mxu0 0
  %421 = vmatpush1.bf16.msra.mxu0 0
  %422 = vmatprep.subr.bf16.mxu0 0
  %423 = vmatpush1.bf16.msra.mxu0 0
  %424 = vmatprep.subr.bf16.mxu0 0
  %425 = vmatpush1.bf16.msra.mxu0 0
  %426 = vmatprep.subr.bf16.mxu0 %v404
  %427 = vmatpush1.bf16.msra.mxu0 %v401
  %428 = vmatprep.subr.bf16.mxu0 0
  %429 = vmatpush2.bf16.msra.mxu0 0
  %430 = vmatprep.subr.bf16.mxu0 0
  %431 = vmatpush2.bf16.msra.mxu0 0
  %432 = vmatprep.subr.bf16.mxu0 0
  %433 = vmatpush2.bf16.msra.mxu0 0
  %434 = vmatprep.subr.bf16.mxu0 0
  %435 = vmatpush2.bf16.msra.mxu0 0
  %436 = vmatprep.subr.bf16.mxu0 0
  %437 = vmatpush2.bf16.msra.mxu0 0
  %438 = vmatprep.subr.bf16.mxu0 0
  %439 = vmatpush2.bf16.msra.mxu0 0
  %440 = vmatprep.subr.bf16.mxu0 0
  %441 = vmatpush2.bf16.msra.mxu0 0
  %442 = vmatprep.subr.bf16.mxu0 0
  %443 = vmatpush2.bf16.msra.mxu0 0
  %444 = vmatprep.mubr.bf16.mxu0 0
  %445 = vmatmul.mubr.bf16.gmra.mxu0 %v395
  %v446 = vpop.f32.mrf.mxu0
  %v447 = vadd.f32 0.0, %v446
  %v448 = vpop.f32.mrf.mxu0
  %v449 = vadd.f32 0.0, %v448
  %v450 = vpop.f32.mrf.mxu0
  %v451 = vadd.f32 0.0, %v450
  %v452 = vpop.f32.mrf.mxu0
  %v453 = vadd.f32 0.0, %v452
  %454 = vmatprep.mubr.bf16.mxu0 0
  %455 = vmatmul.mubr.bf16.gmra.mxu0 %v398
  %v456 = vpop.f32.mrf.mxu0
  %v457 = vadd.f32 0.0, %v456
  %v458 = vpop.f32.mrf.mxu0
  %v459 = vadd.f32 0.0, %v458
  %v460 = vpop.f32.mrf.mxu0
  %v461 = vadd.f32 0.0, %v460
  %v462 = vpop.f32.mrf.mxu0
  %v463 = vadd.f32 0.0, %v462
  %464 = vdwg.mxu0
  %465 = vmatprep.subr.bf16.mxu0 0
  %466 = vmatpush1.bf16.msra.mxu0 0
  %467 = vmatprep.subr.bf16.mxu0 0
  %468 = vmatpush1.bf16.msra.mxu0 0
  %469 = vmatprep.subr.bf16.mxu0 0
  %470 = vmatpush1.bf16.msra.mxu0 0
  %471 = vmatprep.subr.bf16.mxu0 0
  %472 = vmatpush1.bf16.msra.mxu0 0
  %473 = vmatprep.subr.bf16.mxu0 0
  %474 = vmatpush1.bf16.msra.mxu0 0
  %475 = vmatprep.subr.bf16.mxu0 0
  %476 = vmatpush1.bf16.msra.mxu0 0
  %477 = vmatprep.subr.bf16.mxu0 0
  %478 = vmatpush1.bf16.msra.mxu0 0
  %479 = vmatprep.subr.bf16.mxu0 %v410
  %480 = vmatpush1.bf16.msra.mxu0 %v407
  %481 = vmatprep.subr.bf16.mxu0 0
  %482 = vmatpush2.bf16.msra.mxu0 0
  %483 = vmatprep.subr.bf16.mxu0 0
  %484 = vmatpush2.bf16.msra.mxu0 0
  %485 = vmatprep.subr.bf16.mxu0 0
  %486 = vmatpush2.bf16.msra.mxu0 0
  %487 = vmatprep.subr.bf16.mxu0 0
  %488 = vmatpush2.bf16.msra.mxu0 0
  %489 = vmatprep.subr.bf16.mxu0 0
  %490 = vmatpush2.bf16.msra.mxu0 0
  %491 = vmatprep.subr.bf16.mxu0 0
  %492 = vmatpush2.bf16.msra.mxu0 0
  %493 = vmatprep.subr.bf16.mxu0 0
  %494 = vmatpush2.bf16.msra.mxu0 0
  %495 = vmatprep.subr.bf16.mxu0 0
  %496 = vmatpush2.bf16.msra.mxu0 0
  %497 = vmatprep.mubr.bf16.mxu0 0
  %498 = vmatmul.mubr.bf16.gmra.mxu0 %v395
  %v499 = vpop.f32.mrf.mxu0
  %v500 = vadd.f32 0.0, %v499
  %v501 = vpop.f32.mrf.mxu0
  %v502 = vadd.f32 0.0, %v501
  %v503 = vpop.f32.mrf.mxu0
  %v504 = vadd.f32 0.0, %v503
  %v505 = vpop.f32.mrf.mxu0
  %v506 = vadd.f32 0.0, %v505
  %507 = vmatprep.mubr.bf16.mxu0 0
  %508 = vmatmul.mubr.bf16.gmra.mxu0 %v398
  %v509 = vpop.f32.mrf.mxu0
  %v510 = vadd.f32 0.0, %v509
  %v511 = vpop.f32.mrf.mxu0
  %v512 = vadd.f32 0.0, %v511
  %v513 = vpop.f32.mrf.mxu0
  %v514 = vadd.f32 0.0, %v513
  %v515 = vpop.f32.mrf.mxu0
  %v516 = vadd.f32 0.0, %v515
  %517 = vdwg.mxu0
  %v518 = vadd.f32 %v263, %v447
  %v519 = vadd.f32 %v264, %v449
  %v520 = vadd.f32 %v265, %v500
  %v521 = vadd.f32 %v266, %v502
  %v522 = vadd.f32 %v267, %v451
  %v523 = vadd.f32 %v268, %v453
  %v524 = vadd.f32 %v269, %v504
  %v525 = vadd.f32 %v270, %v506
  %v526 = vadd.f32 %v271, %v457
  %v527 = vadd.f32 %v272, %v459
  %v528 = vadd.f32 %v273, %v510
  %v529 = vadd.f32 %v274, %v512
  %v530 = vadd.f32 %v275, %v461
  %v531 = vadd.f32 %v276, %v463
  %v532 = vadd.f32 %v277, %v514
  %v533 = vadd.f32 %v278, %v516
  %v534 = vld [vmem:[%s1] sm:$0x22]
  %v535 = vld [vmem:[%s1 + $0x8] sm:$0x22]
  %s536 = scalar_lea.vmem %s2, 32
  %v537 = vld [vmem:[%s536] sm:$0xf]
  %v538 = vld [vmem:[%s536 + $0x4] sm:$0xf]
  %v539 = vld [vmem:[%s536 + $0x8] sm:$0xf]
  %v540 = vld [vmem:[%s536 + $0xc] sm:$0xf]
  %v543 = vunpack.c.l.b16 %v534
  %v544 = vunpack.c.h.b16 %v534
  %v545 = vunpack.c.l.b16 %v535
  %v546 = vunpack.c.h.b16 %v535
  %v547 = vpack.c.b16 %v543, %v543
  %v548 = vpack.c.b16 %v544, %v544
  %v549 = vpack.c.b16 %v545, %v545
  %v550 = vpack.c.b16 %v546, %v546
  %v552 = vpack.i.b16 %v547, %v547
  %v554 = vlaneseq
  %v555 = vshrl.u32 %v554, 7
  %v556 = vsub.s32 1, %v555
  %v557 = vrot.slane %v552, %v556
  %v559 = vpack.i.b16 %v548, %v548
  %v561 = vlaneseq
  %v562 = vshrl.u32 %v561, 7
  %v563 = vsub.s32 1, %v562
  %v564 = vrot.slane %v559, %v563
  %v566 = vpack.i.b16 %v549, %v549
  %v568 = vlaneseq
  %v569 = vshrl.u32 %v568, 7
  %v570 = vsub.s32 1, %v569
  %v571 = vrot.slane %v566, %v570
  %v573 = vpack.i.b16 %v550, %v550
  %v575 = vlaneseq
  %v576 = vshrl.u32 %v575, 7
  %v577 = vsub.s32 1, %v576
  %v578 = vrot.slane %v573, %v577
  %v583 = vunpack.c.l.b16 %v557
  %v584 = vunpack.c.l.b16 %v564
  %v585 = vunpack.c.l.b16 %v571
  %v586 = vunpack.c.l.b16 %v578
  %v587 = vpack.c.b16 %v584, %v583
  %v588 = vpack.c.b16 %v586, %v585
  %589 = vrot.lane.b32.xlu0 %v587, 2
  %v590 = vpop.permute.xlu0 %589
  %591 = vrot.lane.b32.xlu0 %v588, 2
  %v592 = vpop.permute.xlu0 %591
  %v593 = vrot.slane %v590, 4
  %v594 = vrot.slane %v592, 4
  %vm595 = vcmask 15360
  %v596 = vsel %vm595, %v593, %v590
  %v597 = vsel %vm336, %v593, %v594
  %v598 = vsel %vm595, %v597, %v592
  %v602 = vmul.bf16 %v279, %v596
  %v603 = vmul.bf16 %v280, %v598
  %v604 = vmul.bf16 %v281, %v594
  %v605 = vmul.bf16 %v282, %v596
  %v606 = vmul.bf16 %v283, %v598
  %v607 = vmul.bf16 %v284, %v594
  %v612 = vunpack.c.l.b16 %v537
  %v613 = vunpack.c.l.b16 %v538
  %v614 = vunpack.c.l.b16 %v539
  %v615 = vunpack.c.l.b16 %v540
  %v616 = vpack.c.b16 %v613, %v612
  %v617 = vpack.c.b16 %v615, %v614
  %v624 = vunpack.c.l.b16 %v602
  %v625 = vunpack.c.h.b16 %v602
  %v626 = vunpack.c.l.b16 %v603
  %v627 = vunpack.c.h.b16 %v603
  %v628 = vunpack.c.l.b16 %v604
  %v629 = vunpack.c.l.b16 %v605
  %v630 = vunpack.c.h.b16 %v605
  %v631 = vunpack.c.l.b16 %v606
  %v632 = vunpack.c.h.b16 %v606
  %v633 = vunpack.c.l.b16 %v607
  %v634 = vpack.c.b16 %v629, %v624
  %v635 = vpack.c.b16 %v630, %v625
  %v636 = vpack.c.b16 %v631, %v626
  %v637 = vpack.c.b16 %v632, %v627
  %v638 = vpack.c.b16 %v633, %v628
  %639 = vrot.lane.b32.xlu0 %v634, 126
  %v640 = vpop.permute.xlu0 %639
  %641 = vrot.lane.b32.xlu0 %v635, 126
  %v642 = vpop.permute.xlu0 %641
  %643 = vrot.lane.b32.xlu0 %v636, 126
  %v644 = vpop.permute.xlu0 %643
  %645 = vrot.lane.b32.xlu0 %v637, 126
  %v646 = vpop.permute.xlu0 %645
  %647 = vrot.lane.b32.xlu0 %v638, 126
  %v648 = vpop.permute.xlu0 %647
  %vm649 = vcmask 1031168
  %v650 = vsel %vm649, %v640, %v642
  %v651 = vsel %vm649, %v642, %v644
  %v652 = vsel %vm649, %v644, %v646
  %v653 = vsel %vm649, %v646, %v648
  %v655 = vsel %vm137, %v616, 0
  %v658 = vsel %vm137, %v617, 0
  %v661 = vsel %vm144, %v650, 0
  %v664 = vsel %vm144, %v651, 0
  %v667 = vsel %vm144, %v652, 0
  %v670 = vsel %vm144, %v653, 0
  %672 = vmatprep.subr.bf16.mxu0 0
  %673 = vmatpush1.bf16.msra.mxu0 0
  %674 = vmatprep.subr.bf16.mxu0 0
  %675 = vmatpush1.bf16.msra.mxu0 0
  %676 = vmatprep.subr.bf16.mxu0 0
  %677 = vmatpush1.bf16.msra.mxu0 0
  %678 = vmatprep.subr.bf16.mxu0 0
  %679 = vmatpush1.bf16.msra.mxu0 0
  %680 = vmatprep.subr.bf16.mxu0 0
  %681 = vmatpush1.bf16.msra.mxu0 0
  %682 = vmatprep.subr.bf16.mxu0 0
  %683 = vmatpush1.bf16.msra.mxu0 0
  %684 = vmatprep.subr.bf16.mxu0 0
  %685 = vmatpush1.bf16.msra.mxu0 0
  %686 = vmatprep.subr.bf16.mxu0 %v664
  %687 = vmatpush1.bf16.msra.mxu0 %v661
  %688 = vmatprep.subr.bf16.mxu0 0
  %689 = vmatpush2.bf16.msra.mxu0 0
  %690 = vmatprep.subr.bf16.mxu0 0
  %691 = vmatpush2.bf16.msra.mxu0 0
  %692 = vmatprep.subr.bf16.mxu0 0
  %693 = vmatpush2.bf16.msra.mxu0 0
  %694 = vmatprep.subr.bf16.mxu0 0
  %695 = vmatpush2.bf16.msra.mxu0 0
  %696 = vmatprep.subr.bf16.mxu0 0
  %697 = vmatpush2.bf16.msra.mxu0 0
  %698 = vmatprep.subr.bf16.mxu0 0
  %699 = vmatpush2.bf16.msra.mxu0 0
  %700 = vmatprep.subr.bf16.mxu0 0
  %701 = vmatpush2.bf16.msra.mxu0 0
  %702 = vmatprep.subr.bf16.mxu0 0
  %703 = vmatpush2.bf16.msra.mxu0 0
  %704 = vmatprep.mubr.bf16.mxu0 0
  %705 = vmatmul.mubr.bf16.gmra.mxu0 %v655
  %v706 = vpop.f32.mrf.mxu0
  %v707 = vadd.f32 0.0, %v706
  %v708 = vpop.f32.mrf.mxu0
  %v709 = vadd.f32 0.0, %v708
  %v710 = vpop.f32.mrf.mxu0
  %v711 = vadd.f32 0.0, %v710
  %v712 = vpop.f32.mrf.mxu0
  %v713 = vadd.f32 0.0, %v712
  %714 = vmatprep.mubr.bf16.mxu0 0
  %715 = vmatmul.mubr.bf16.gmra.mxu0 %v658
  %v716 = vpop.f32.mrf.mxu0
  %v717 = vadd.f32 0.0, %v716
  %v718 = vpop.f32.mrf.mxu0
  %v719 = vadd.f32 0.0, %v718
  %v720 = vpop.f32.mrf.mxu0
  %v721 = vadd.f32 0.0, %v720
  %v722 = vpop.f32.mrf.mxu0
  %v723 = vadd.f32 0.0, %v722
  %724 = vdwg.mxu0
  %725 = vmatprep.subr.bf16.mxu0 0
  %726 = vmatpush1.bf16.msra.mxu0 0
  %727 = vmatprep.subr.bf16.mxu0 0
  %728 = vmatpush1.bf16.msra.mxu0 0
  %729 = vmatprep.subr.bf16.mxu0 0
  %730 = vmatpush1.bf16.msra.mxu0 0
  %731 = vmatprep.subr.bf16.mxu0 0
  %732 = vmatpush1.bf16.msra.mxu0 0
  %733 = vmatprep.subr.bf16.mxu0 0
  %734 = vmatpush1.bf16.msra.mxu0 0
  %735 = vmatprep.subr.bf16.mxu0 0
  %736 = vmatpush1.bf16.msra.mxu0 0
  %737 = vmatprep.subr.bf16.mxu0 0
  %738 = vmatpush1.bf16.msra.mxu0 0
  %739 = vmatprep.subr.bf16.mxu0 %v670
  %740 = vmatpush1.bf16.msra.mxu0 %v667
  %741 = vmatprep.subr.bf16.mxu0 0
  %742 = vmatpush2.bf16.msra.mxu0 0
  %743 = vmatprep.subr.bf16.mxu0 0
  %744 = vmatpush2.bf16.msra.mxu0 0
  %745 = vmatprep.subr.bf16.mxu0 0
  %746 = vmatpush2.bf16.msra.mxu0 0
  %747 = vmatprep.subr.bf16.mxu0 0
  %748 = vmatpush2.bf16.msra.mxu0 0
  %749 = vmatprep.subr.bf16.mxu0 0
  %750 = vmatpush2.bf16.msra.mxu0 0
  %751 = vmatprep.subr.bf16.mxu0 0
  %752 = vmatpush2.bf16.msra.mxu0 0
  %753 = vmatprep.subr.bf16.mxu0 0
  %754 = vmatpush2.bf16.msra.mxu0 0
  %755 = vmatprep.subr.bf16.mxu0 0
  %756 = vmatpush2.bf16.msra.mxu0 0
  %757 = vmatprep.mubr.bf16.mxu0 0
  %758 = vmatmul.mubr.bf16.gmra.mxu0 %v655
  %v759 = vpop.f32.mrf.mxu0
  %v760 = vadd.f32 0.0, %v759
  %v761 = vpop.f32.mrf.mxu0
  %v762 = vadd.f32 0.0, %v761
  %v763 = vpop.f32.mrf.mxu0
  %v764 = vadd.f32 0.0, %v763
  %v765 = vpop.f32.mrf.mxu0
  %v766 = vadd.f32 0.0, %v765
  %767 = vmatprep.mubr.bf16.mxu0 0
  %768 = vmatmul.mubr.bf16.gmra.mxu0 %v658
  %v769 = vpop.f32.mrf.mxu0
  %v770 = vadd.f32 0.0, %v769
  %v771 = vpop.f32.mrf.mxu0
  %v772 = vadd.f32 0.0, %v771
  %v773 = vpop.f32.mrf.mxu0
  %v774 = vadd.f32 0.0, %v773
  %v775 = vpop.f32.mrf.mxu0
  %v776 = vadd.f32 0.0, %v775
  %777 = vdwg.mxu0
  %v778 = vadd.f32 %v518, %v707
  %v779 = vadd.f32 %v519, %v709
  %v780 = vadd.f32 %v520, %v760
  %v781 = vadd.f32 %v521, %v762
  %v782 = vadd.f32 %v522, %v711
  %v783 = vadd.f32 %v523, %v713
  %v784 = vadd.f32 %v524, %v764
  %v785 = vadd.f32 %v525, %v766
  %v786 = vadd.f32 %v526, %v717
  %v787 = vadd.f32 %v527, %v719
  %v788 = vadd.f32 %v528, %v770
  %v789 = vadd.f32 %v529, %v772
  %v790 = vadd.f32 %v530, %v721
  %v791 = vadd.f32 %v531, %v723
  %v792 = vadd.f32 %v532, %v774
  %v793 = vadd.f32 %v533, %v776
  %s794 = scalar_lea.vmem %s2, 48
  %v795 = vld [vmem:[%s794] sm:$0xf]
  %v796 = vld [vmem:[%s794 + $0x4] sm:$0xf]
  %v797 = vld [vmem:[%s794 + $0x8] sm:$0xf]
  %v798 = vld [vmem:[%s794 + $0xc] sm:$0xf]
  %v799 = vshrl.u32 %v547, 16
  %v800 = vpack.i.b16 %v799, %v799
  %v802 = vlaneseq
  %v803 = vshrl.u32 %v802, 7
  %v804 = vsub.s32 1, %v803
  %v805 = vrot.slane %v800, %v804
  %v806 = vshrl.u32 %v548, 16
  %v807 = vpack.i.b16 %v806, %v806
  %v809 = vlaneseq
  %v810 = vshrl.u32 %v809, 7
  %v811 = vsub.s32 1, %v810
  %v812 = vrot.slane %v807, %v811
  %v813 = vshrl.u32 %v549, 16
  %v814 = vpack.i.b16 %v813, %v813
  %v816 = vlaneseq
  %v817 = vshrl.u32 %v816, 7
  %v818 = vsub.s32 1, %v817
  %v819 = vrot.slane %v814, %v818
  %v820 = vshrl.u32 %v550, 16
  %v821 = vpack.i.b16 %v820, %v820
  %v823 = vlaneseq
  %v824 = vshrl.u32 %v823, 7
  %v825 = vsub.s32 1, %v824
  %v826 = vrot.slane %v821, %v825
  %v831 = vunpack.c.l.b16 %v805
  %v832 = vunpack.c.l.b16 %v812
  %v833 = vunpack.c.l.b16 %v819
  %v834 = vunpack.c.l.b16 %v826
  %v835 = vpack.c.b16 %v832, %v831
  %v836 = vpack.c.b16 %v834, %v833
  %837 = vrot.lane.b32.xlu0 %v835, 16
  %v838 = vpop.permute.xlu0 %837
  %839 = vrot.lane.b32.xlu0 %v836, 16
  %v840 = vpop.permute.xlu0 %839
  %v841 = vrot.slane %v838, 4
  %v842 = vrot.slane %v840, 4
  %vm843 = vcmask 130048
  %v844 = vsel %vm843, %v841, %v838
  %v845 = vsel %vm336, %v841, %v842
  %v846 = vsel %vm843, %v845, %v840
  %v850 = vmul.bf16 %v279, %v844
  %v851 = vmul.bf16 %v280, %v846
  %v852 = vmul.bf16 %v281, %v842
  %v853 = vmul.bf16 %v282, %v844
  %v854 = vmul.bf16 %v283, %v846
  %v855 = vmul.bf16 %v284, %v842
  %v860 = vunpack.c.l.b16 %v795
  %v861 = vunpack.c.l.b16 %v796
  %v862 = vunpack.c.l.b16 %v797
  %v863 = vunpack.c.l.b16 %v798
  %v864 = vpack.c.b16 %v861, %v860
  %v865 = vpack.c.b16 %v863, %v862
  %v872 = vunpack.c.l.b16 %v850
  %v873 = vunpack.c.h.b16 %v850
  %v874 = vunpack.c.l.b16 %v851
  %v875 = vunpack.c.h.b16 %v851
  %v876 = vunpack.c.l.b16 %v852
  %v877 = vunpack.c.l.b16 %v853
  %v878 = vunpack.c.h.b16 %v853
  %v879 = vunpack.c.l.b16 %v854
  %v880 = vunpack.c.h.b16 %v854
  %v881 = vunpack.c.l.b16 %v855
  %v882 = vpack.c.b16 %v877, %v872
  %v883 = vpack.c.b16 %v878, %v873
  %v884 = vpack.c.b16 %v879, %v874
  %v885 = vpack.c.b16 %v880, %v875
  %v886 = vpack.c.b16 %v881, %v876
  %887 = vrot.lane.b32.xlu0 %v882, 112
  %v888 = vpop.permute.xlu0 %887
  %889 = vrot.lane.b32.xlu0 %v883, 112
  %v890 = vpop.permute.xlu0 %889
  %891 = vrot.lane.b32.xlu0 %v884, 112
  %v892 = vpop.permute.xlu0 %891
  %893 = vrot.lane.b32.xlu0 %v885, 112
  %v894 = vpop.permute.xlu0 %893
  %895 = vrot.lane.b32.xlu0 %v886, 112
  %v896 = vpop.permute.xlu0 %895
  %vm897 = vcmask 916480
  %v898 = vsel %vm897, %v888, %v890
  %v899 = vsel %vm897, %v890, %v892
  %v900 = vsel %vm897, %v892, %v894
  %v901 = vsel %vm897, %v894, %v896
  %v903 = vsel %vm137, %v864, 0
  %v906 = vsel %vm137, %v865, 0
  %v909 = vsel %vm144, %v898, 0
  %v912 = vsel %vm144, %v899, 0
  %v915 = vsel %vm144, %v900, 0
  %v918 = vsel %vm144, %v901, 0
  %920 = vmatprep.subr.bf16.mxu0 0
  %921 = vmatpush1.bf16.msra.mxu0 0
  %922 = vmatprep.subr.bf16.mxu0 0
  %923 = vmatpush1.bf16.msra.mxu0 0
  %924 = vmatprep.subr.bf16.mxu0 0
  %925 = vmatpush1.bf16.msra.mxu0 0
  %926 = vmatprep.subr.bf16.mxu0 0
  %927 = vmatpush1.bf16.msra.mxu0 0
  %928 = vmatprep.subr.bf16.mxu0 0
  %929 = vmatpush1.bf16.msra.mxu0 0
  %930 = vmatprep.subr.bf16.mxu0 0
  %931 = vmatpush1.bf16.msra.mxu0 0
  %932 = vmatprep.subr.bf16.mxu0 0
  %933 = vmatpush1.bf16.msra.mxu0 0
  %934 = vmatprep.subr.bf16.mxu0 %v912
  %935 = vmatpush1.bf16.msra.mxu0 %v909
  %936 = vmatprep.subr.bf16.mxu0 0
  %937 = vmatpush2.bf16.msra.mxu0 0
  %938 = vmatprep.subr.bf16.mxu0 0
  %939 = vmatpush2.bf16.msra.mxu0 0
  %940 = vmatprep.subr.bf16.mxu0 0
  %941 = vmatpush2.bf16.msra.mxu0 0
  %942 = vmatprep.subr.bf16.mxu0 0
  %943 = vmatpush2.bf16.msra.mxu0 0
  %944 = vmatprep.subr.bf16.mxu0 0
  %945 = vmatpush2.bf16.msra.mxu0 0
  %946 = vmatprep.subr.bf16.mxu0 0
  %947 = vmatpush2.bf16.msra.mxu0 0
  %948 = vmatprep.subr.bf16.mxu0 0
  %949 = vmatpush2.bf16.msra.mxu0 0
  %950 = vmatprep.subr.bf16.mxu0 0
  %951 = vmatpush2.bf16.msra.mxu0 0
  %952 = vmatprep.mubr.bf16.mxu0 0
  %953 = vmatmul.mubr.bf16.gmra.mxu0 %v903
  %v954 = vpop.f32.mrf.mxu0
  %v955 = vadd.f32 0.0, %v954
  %v956 = vpop.f32.mrf.mxu0
  %v957 = vadd.f32 0.0, %v956
  %v958 = vpop.f32.mrf.mxu0
  %v959 = vadd.f32 0.0, %v958
  %v960 = vpop.f32.mrf.mxu0
  %v961 = vadd.f32 0.0, %v960
  %962 = vmatprep.mubr.bf16.mxu0 0
  %963 = vmatmul.mubr.bf16.gmra.mxu0 %v906
  %v964 = vpop.f32.mrf.mxu0
  %v965 = vadd.f32 0.0, %v964
  %v966 = vpop.f32.mrf.mxu0
  %v967 = vadd.f32 0.0, %v966
  %v968 = vpop.f32.mrf.mxu0
  %v969 = vadd.f32 0.0, %v968
  %v970 = vpop.f32.mrf.mxu0
  %v971 = vadd.f32 0.0, %v970
  %972 = vdwg.mxu0
  %973 = vmatprep.subr.bf16.mxu0 0
  %974 = vmatpush1.bf16.msra.mxu0 0
  %975 = vmatprep.subr.bf16.mxu0 0
  %976 = vmatpush1.bf16.msra.mxu0 0
  %977 = vmatprep.subr.bf16.mxu0 0
  %978 = vmatpush1.bf16.msra.mxu0 0
  %979 = vmatprep.subr.bf16.mxu0 0
  %980 = vmatpush1.bf16.msra.mxu0 0
  %981 = vmatprep.subr.bf16.mxu0 0
  %982 = vmatpush1.bf16.msra.mxu0 0
  %983 = vmatprep.subr.bf16.mxu0 0
  %984 = vmatpush1.bf16.msra.mxu0 0
  %985 = vmatprep.subr.bf16.mxu0 0
  %986 = vmatpush1.bf16.msra.mxu0 0
  %987 = vmatprep.subr.bf16.mxu0 %v918
  %988 = vmatpush1.bf16.msra.mxu0 %v915
  %989 = vmatprep.subr.bf16.mxu0 0
  %990 = vmatpush2.bf16.msra.mxu0 0
  %991 = vmatprep.subr.bf16.mxu0 0
  %992 = vmatpush2.bf16.msra.mxu0 0
  %993 = vmatprep.subr.bf16.mxu0 0
  %994 = vmatpush2.bf16.msra.mxu0 0
  %995 = vmatprep.subr.bf16.mxu0 0
  %996 = vmatpush2.bf16.msra.mxu0 0
  %997 = vmatprep.subr.bf16.mxu0 0
  %998 = vmatpush2.bf16.msra.mxu0 0
  %999 = vmatprep.subr.bf16.mxu0 0
  %1000 = vmatpush2.bf16.msra.mxu0 0
  %1001 = vmatprep.subr.bf16.mxu0 0
  %1002 = vmatpush2.bf16.msra.mxu0 0
  %1003 = vmatprep.subr.bf16.mxu0 0
  %1004 = vmatpush2.bf16.msra.mxu0 0
  %1005 = vmatprep.mubr.bf16.mxu0 0
  %1006 = vmatmul.mubr.bf16.gmra.mxu0 %v903
  %v1007 = vpop.f32.mrf.mxu0
  %v1008 = vadd.f32 0.0, %v1007
  %v1009 = vpop.f32.mrf.mxu0
  %v1010 = vadd.f32 0.0, %v1009
  %v1011 = vpop.f32.mrf.mxu0
  %v1012 = vadd.f32 0.0, %v1011
  %v1013 = vpop.f32.mrf.mxu0
  %v1014 = vadd.f32 0.0, %v1013
  %1015 = vmatprep.mubr.bf16.mxu0 0
  %1016 = vmatmul.mubr.bf16.gmra.mxu0 %v906
  %v1017 = vpop.f32.mrf.mxu0
  %v1018 = vadd.f32 0.0, %v1017
  %v1019 = vpop.f32.mrf.mxu0
  %v1020 = vadd.f32 0.0, %v1019
  %v1021 = vpop.f32.mrf.mxu0
  %v1022 = vadd.f32 0.0, %v1021
  %v1023 = vpop.f32.mrf.mxu0
  %v1024 = vadd.f32 0.0, %v1023
  %1025 = vdwg.mxu0
  %v1026 = vadd.f32 %v778, %v955
  %v1027 = vadd.f32 %v779, %v957
  %v1028 = vadd.f32 %v780, %v1008
  %v1029 = vadd.f32 %v781, %v1010
  %v1030 = vadd.f32 %v782, %v959
  %v1031 = vadd.f32 %v783, %v961
  %v1032 = vadd.f32 %v784, %v1012
  %v1033 = vadd.f32 %v785, %v1014
  %v1034 = vadd.f32 %v786, %v965
  %v1035 = vadd.f32 %v787, %v967
  %v1036 = vadd.f32 %v788, %v1018
  %v1037 = vadd.f32 %v789, %v1020
  %v1038 = vadd.f32 %v790, %v969
  %v1039 = vadd.f32 %v791, %v971
  %v1040 = vadd.f32 %v792, %v1022
  %v1041 = vadd.f32 %v793, %v1024
  %v1042 = vld [vmem:[%s1] sm:$0x44]
  %v1043 = vld [vmem:[%s1 + $0x8] sm:$0x44]
  %s1044 = scalar_lea.vmem %s2, 64
  %v1045 = vld [vmem:[%s1044] sm:$0xf]
  %v1046 = vld [vmem:[%s1044 + $0x4] sm:$0xf]
  %v1047 = vld [vmem:[%s1044 + $0x8] sm:$0xf]
  %v1048 = vld [vmem:[%s1044 + $0xc] sm:$0xf]
  %v1051 = vunpack.c.l.b16 %v1042
  %v1052 = vunpack.c.h.b16 %v1042
  %v1053 = vunpack.c.l.b16 %v1043
  %v1054 = vunpack.c.h.b16 %v1043
  %v1055 = vpack.c.b16 %v1051, %v1051
  %v1056 = vpack.c.b16 %v1052, %v1052
  %v1057 = vpack.c.b16 %v1053, %v1053
  %v1058 = vpack.c.b16 %v1054, %v1054
  %v1060 = vpack.i.b16 %v1055, %v1055
  %v1062 = vlaneseq
  %v1063 = vshrl.u32 %v1062, 7
  %v1064 = vsub.s32 2, %v1063
  %v1065 = vrot.slane %v1060, %v1064
  %v1067 = vpack.i.b16 %v1056, %v1056
  %v1069 = vlaneseq
  %v1070 = vshrl.u32 %v1069, 7
  %v1071 = vsub.s32 2, %v1070
  %v1072 = vrot.slane %v1067, %v1071
  %v1074 = vpack.i.b16 %v1057, %v1057
  %v1076 = vlaneseq
  %v1077 = vshrl.u32 %v1076, 7
  %v1078 = vsub.s32 2, %v1077
  %v1079 = vrot.slane %v1074, %v1078
  %v1081 = vpack.i.b16 %v1058, %v1058
  %v1083 = vlaneseq
  %v1084 = vshrl.u32 %v1083, 7
  %v1085 = vsub.s32 2, %v1084
  %v1086 = vrot.slane %v1081, %v1085
  %v1091 = vunpack.c.l.b16 %v1065
  %v1092 = vunpack.c.l.b16 %v1072
  %v1093 = vunpack.c.l.b16 %v1079
  %v1094 = vunpack.c.l.b16 %v1086
  %v1095 = vpack.c.b16 %v1092, %v1091
  %v1096 = vpack.c.b16 %v1094, %v1093
  %1097 = vrot.lane.b32.xlu0 %v1095, 17
  %v1098 = vpop.permute.xlu0 %1097
  %1099 = vrot.lane.b32.xlu0 %v1096, 17
  %v1100 = vpop.permute.xlu0 %1099
  %v1101 = vrot.slane %v1098, 4
  %v1102 = vrot.slane %v1100, 4
  %vm1103 = vcmask 138240
  %v1104 = vsel %vm1103, %v1101, %v1098
  %v1105 = vsel %vm336, %v1101, %v1102
  %v1106 = vsel %vm1103, %v1105, %v1100
  %v1110 = vmul.bf16 %v279, %v1104
  %v1111 = vmul.bf16 %v280, %v1106
  %v1112 = vmul.bf16 %v281, %v1102
  %v1113 = vmul.bf16 %v282, %v1104
  %v1114 = vmul.bf16 %v283, %v1106
  %v1115 = vmul.bf16 %v284, %v1102
  %v1120 = vunpack.c.l.b16 %v1045
  %v1121 = vunpack.c.l.b16 %v1046
  %v1122 = vunpack.c.l.b16 %v1047
  %v1123 = vunpack.c.l.b16 %v1048
  %v1124 = vpack.c.b16 %v1121, %v1120
  %v1125 = vpack.c.b16 %v1123, %v1122
  %v1132 = vunpack.c.l.b16 %v1110
  %v1133 = vunpack.c.h.b16 %v1110
  %v1134 = vunpack.c.l.b16 %v1111
  %v1135 = vunpack.c.h.b16 %v1111
  %v1136 = vunpack.c.l.b16 %v1112
  %v1137 = vunpack.c.l.b16 %v1113
  %v1138 = vunpack.c.h.b16 %v1113
  %v1139 = vunpack.c.l.b16 %v1114
  %v1140 = vunpack.c.h.b16 %v1114
  %v1141 = vunpack.c.l.b16 %v1115
  %v1142 = vpack.c.b16 %v1137, %v1132
  %v1143 = vpack.c.b16 %v1138, %v1133
  %v1144 = vpack.c.b16 %v1139, %v1134
  %v1145 = vpack.c.b16 %v1140, %v1135
  %v1146 = vpack.c.b16 %v1141, %v1136
  %1147 = vrot.lane.b32.xlu0 %v1142, 111
  %v1148 = vpop.permute.xlu0 %1147
  %1149 = vrot.lane.b32.xlu0 %v1143, 111
  %v1150 = vpop.permute.xlu0 %1149
  %1151 = vrot.lane.b32.xlu0 %v1144, 111
  %v1152 = vpop.permute.xlu0 %1151
  %1153 = vrot.lane.b32.xlu0 %v1145, 111
  %v1154 = vpop.permute.xlu0 %1153
  %1155 = vrot.lane.b32.xlu0 %v1146, 111
  %v1156 = vpop.permute.xlu0 %1155
  %vm1157 = vcmask 908288
  %v1158 = vsel %vm1157, %v1148, %v1150
  %v1159 = vsel %vm1157, %v1150, %v1152
  %v1160 = vsel %vm1157, %v1152, %v1154
  %v1161 = vsel %vm1157, %v1154, %v1156
  %v1163 = vsel %vm137, %v1124, 0
  %v1166 = vsel %vm137, %v1125, 0
  %v1169 = vsel %vm144, %v1158, 0
  %v1172 = vsel %vm144, %v1159, 0
  %v1175 = vsel %vm144, %v1160, 0
  %v1178 = vsel %vm144, %v1161, 0
  %1180 = vmatprep.subr.bf16.mxu0 0
  %1181 = vmatpush1.bf16.msra.mxu0 0
  %1182 = vmatprep.subr.bf16.mxu0 0
  %1183 = vmatpush1.bf16.msra.mxu0 0
  %1184 = vmatprep.subr.bf16.mxu0 0
  %1185 = vmatpush1.bf16.msra.mxu0 0
  %1186 = vmatprep.subr.bf16.mxu0 0
  %1187 = vmatpush1.bf16.msra.mxu0 0
  %1188 = vmatprep.subr.bf16.mxu0 0
  %1189 = vmatpush1.bf16.msra.mxu0 0
  %1190 = vmatprep.subr.bf16.mxu0 0
  %1191 = vmatpush1.bf16.msra.mxu0 0
  %1192 = vmatprep.subr.bf16.mxu0 0
  %1193 = vmatpush1.bf16.msra.mxu0 0
  %1194 = vmatprep.subr.bf16.mxu0 %v1172
  %1195 = vmatpush1.bf16.msra.mxu0 %v1169
  %1196 = vmatprep.subr.bf16.mxu0 0
  %1197 = vmatpush2.bf16.msra.mxu0 0
  %1198 = vmatprep.subr.bf16.mxu0 0
  %1199 = vmatpush2.bf16.msra.mxu0 0
  %1200 = vmatprep.subr.bf16.mxu0 0
  %1201 = vmatpush2.bf16.msra.mxu0 0
  %1202 = vmatprep.subr.bf16.mxu0 0
  %1203 = vmatpush2.bf16.msra.mxu0 0
  %1204 = vmatprep.subr.bf16.mxu0 0
  %1205 = vmatpush2.bf16.msra.mxu0 0
  %1206 = vmatprep.subr.bf16.mxu0 0
  %1207 = vmatpush2.bf16.msra.mxu0 0
  %1208 = vmatprep.subr.bf16.mxu0 0
  %1209 = vmatpush2.bf16.msra.mxu0 0
  %1210 = vmatprep.subr.bf16.mxu0 0
  %1211 = vmatpush2.bf16.msra.mxu0 0
  %1212 = vmatprep.mubr.bf16.mxu0 0
  %1213 = vmatmul.mubr.bf16.gmra.mxu0 %v1163
  %v1214 = vpop.f32.mrf.mxu0
  %v1215 = vadd.f32 0.0, %v1214
  %v1216 = vpop.f32.mrf.mxu0
  %v1217 = vadd.f32 0.0, %v1216
  %v1218 = vpop.f32.mrf.mxu0
  %v1219 = vadd.f32 0.0, %v1218
  %v1220 = vpop.f32.mrf.mxu0
  %v1221 = vadd.f32 0.0, %v1220
  %1222 = vmatprep.mubr.bf16.mxu0 0
  %1223 = vmatmul.mubr.bf16.gmra.mxu0 %v1166
  %v1224 = vpop.f32.mrf.mxu0
  %v1225 = vadd.f32 0.0, %v1224
  %v1226 = vpop.f32.mrf.mxu0
  %v1227 = vadd.f32 0.0, %v1226
  %v1228 = vpop.f32.mrf.mxu0
  %v1229 = vadd.f32 0.0, %v1228
  %v1230 = vpop.f32.mrf.mxu0
  %v1231 = vadd.f32 0.0, %v1230
  %1232 = vdwg.mxu0
  %1233 = vmatprep.subr.bf16.mxu0 0
  %1234 = vmatpush1.bf16.msra.mxu0 0
  %1235 = vmatprep.subr.bf16.mxu0 0
  %1236 = vmatpush1.bf16.msra.mxu0 0
  %1237 = vmatprep.subr.bf16.mxu0 0
  %1238 = vmatpush1.bf16.msra.mxu0 0
  %1239 = vmatprep.subr.bf16.mxu0 0
  %1240 = vmatpush1.bf16.msra.mxu0 0
  %1241 = vmatprep.subr.bf16.mxu0 0
  %1242 = vmatpush1.bf16.msra.mxu0 0
  %1243 = vmatprep.subr.bf16.mxu0 0
  %1244 = vmatpush1.bf16.msra.mxu0 0
  %1245 = vmatprep.subr.bf16.mxu0 0
  %1246 = vmatpush1.bf16.msra.mxu0 0
  %1247 = vmatprep.subr.bf16.mxu0 %v1178
  %1248 = vmatpush1.bf16.msra.mxu0 %v1175
  %1249 = vmatprep.subr.bf16.mxu0 0
  %1250 = vmatpush2.bf16.msra.mxu0 0
  %1251 = vmatprep.subr.bf16.mxu0 0
  %1252 = vmatpush2.bf16.msra.mxu0 0
  %1253 = vmatprep.subr.bf16.mxu0 0
  %1254 = vmatpush2.bf16.msra.mxu0 0
  %1255 = vmatprep.subr.bf16.mxu0 0
  %1256 = vmatpush2.bf16.msra.mxu0 0
  %1257 = vmatprep.subr.bf16.mxu0 0
  %1258 = vmatpush2.bf16.msra.mxu0 0
  %1259 = vmatprep.subr.bf16.mxu0 0
  %1260 = vmatpush2.bf16.msra.mxu0 0
  %1261 = vmatprep.subr.bf16.mxu0 0
  %1262 = vmatpush2.bf16.msra.mxu0 0
  %1263 = vmatprep.subr.bf16.mxu0 0
  %1264 = vmatpush2.bf16.msra.mxu0 0
  %1265 = vmatprep.mubr.bf16.mxu0 0
  %1266 = vmatmul.mubr.bf16.gmra.mxu0 %v1163
  %v1267 = vpop.f32.mrf.mxu0
  %v1268 = vadd.f32 0.0, %v1267
  %v1269 = vpop.f32.mrf.mxu0
  %v1270 = vadd.f32 0.0, %v1269
  %v1271 = vpop.f32.mrf.mxu0
  %v1272 = vadd.f32 0.0, %v1271
  %v1273 = vpop.f32.mrf.mxu0
  %v1274 = vadd.f32 0.0, %v1273
  %1275 = vmatprep.mubr.bf16.mxu0 0
  %1276 = vmatmul.mubr.bf16.gmra.mxu0 %v1166
  %v1277 = vpop.f32.mrf.mxu0
  %v1278 = vadd.f32 0.0, %v1277
  %v1279 = vpop.f32.mrf.mxu0
  %v1280 = vadd.f32 0.0, %v1279
  %v1281 = vpop.f32.mrf.mxu0
  %v1282 = vadd.f32 0.0, %v1281
  %v1283 = vpop.f32.mrf.mxu0
  %v1284 = vadd.f32 0.0, %v1283
  %1285 = vdwg.mxu0
  %v1286 = vadd.f32 %v1026, %v1215
  %v1287 = vadd.f32 %v1027, %v1217
  %v1288 = vadd.f32 %v1028, %v1268
  %v1289 = vadd.f32 %v1029, %v1270
  %v1290 = vadd.f32 %v1030, %v1219
  %v1291 = vadd.f32 %v1031, %v1221
  %v1292 = vadd.f32 %v1032, %v1272
  %v1293 = vadd.f32 %v1033, %v1274
  %v1294 = vadd.f32 %v1034, %v1225
  %v1295 = vadd.f32 %v1035, %v1227
  %v1296 = vadd.f32 %v1036, %v1278
  %v1297 = vadd.f32 %v1037, %v1280
  %v1298 = vadd.f32 %v1038, %v1229
  %v1299 = vadd.f32 %v1039, %v1231
  %v1300 = vadd.f32 %v1040, %v1282
  %v1301 = vadd.f32 %v1041, %v1284
  %s1302 = scalar_lea.vmem %s2, 80
  %v1303 = vld [vmem:[%s1302] sm:$0xf]
  %v1304 = vld [vmem:[%s1302 + $0x4] sm:$0xf]
  %v1305 = vld [vmem:[%s1302 + $0x8] sm:$0xf]
  %v1306 = vld [vmem:[%s1302 + $0xc] sm:$0xf]
  %v1307 = vshrl.u32 %v1055, 16
  %v1308 = vpack.i.b16 %v1307, %v1307
  %v1310 = vlaneseq
  %v1311 = vshrl.u32 %v1310, 7
  %v1312 = vsub.s32 2, %v1311
  %v1313 = vrot.slane %v1308, %v1312
  %v1314 = vshrl.u32 %v1056, 16
  %v1315 = vpack.i.b16 %v1314, %v1314
  %v1317 = vlaneseq
  %v1318 = vshrl.u32 %v1317, 7
  %v1319 = vsub.s32 2, %v1318
  %v1320 = vrot.slane %v1315, %v1319
  %v1321 = vshrl.u32 %v1057, 16
  %v1322 = vpack.i.b16 %v1321, %v1321
  %v1324 = vlaneseq
  %v1325 = vshrl.u32 %v1324, 7
  %v1326 = vsub.s32 2, %v1325
  %v1327 = vrot.slane %v1322, %v1326
  %v1328 = vshrl.u32 %v1058, 16
  %v1329 = vpack.i.b16 %v1328, %v1328
  %v1331 = vlaneseq
  %v1332 = vshrl.u32 %v1331, 7
  %v1333 = vsub.s32 2, %v1332
  %v1334 = vrot.slane %v1329, %v1333
  %v1339 = vunpack.c.l.b16 %v1313
  %v1340 = vunpack.c.l.b16 %v1320
  %v1341 = vunpack.c.l.b16 %v1327
  %v1342 = vunpack.c.l.b16 %v1334
  %v1343 = vpack.c.b16 %v1340, %v1339
  %v1344 = vpack.c.b16 %v1342, %v1341
  %1345 = vrot.lane.b32.xlu0 %v1343, 18
  %v1346 = vpop.permute.xlu0 %1345
  %1347 = vrot.lane.b32.xlu0 %v1344, 18
  %v1348 = vpop.permute.xlu0 %1347
  %v1349 = vrot.slane %v1346, 4
  %v1350 = vrot.slane %v1348, 4
  %vm1351 = vcmask 146432
  %v1352 = vsel %vm1351, %v1349, %v1346
  %v1353 = vsel %vm336, %v1349, %v1350
  %v1354 = vsel %vm1351, %v1353, %v1348
  %v1358 = vmul.bf16 %v279, %v1352
  %v1359 = vmul.bf16 %v280, %v1354
  %v1360 = vmul.bf16 %v281, %v1350
  %v1361 = vmul.bf16 %v282, %v1352
  %v1362 = vmul.bf16 %v283, %v1354
  %v1363 = vmul.bf16 %v284, %v1350
  %v1368 = vunpack.c.l.b16 %v1303
  %v1369 = vunpack.c.l.b16 %v1304
  %v1370 = vunpack.c.l.b16 %v1305
  %v1371 = vunpack.c.l.b16 %v1306
  %v1372 = vpack.c.b16 %v1369, %v1368
  %v1373 = vpack.c.b16 %v1371, %v1370
  %v1380 = vunpack.c.l.b16 %v1358
  %v1381 = vunpack.c.h.b16 %v1358
  %v1382 = vunpack.c.l.b16 %v1359
  %v1383 = vunpack.c.h.b16 %v1359
  %v1384 = vunpack.c.l.b16 %v1360
  %v1385 = vunpack.c.l.b16 %v1361
  %v1386 = vunpack.c.h.b16 %v1361
  %v1387 = vunpack.c.l.b16 %v1362
  %v1388 = vunpack.c.h.b16 %v1362
  %v1389 = vunpack.c.l.b16 %v1363
  %v1390 = vpack.c.b16 %v1385, %v1380
  %v1391 = vpack.c.b16 %v1386, %v1381
  %v1392 = vpack.c.b16 %v1387, %v1382
  %v1393 = vpack.c.b16 %v1388, %v1383
  %v1394 = vpack.c.b16 %v1389, %v1384
  %1395 = vrot.lane.b32.xlu0 %v1390, 110
  %v1396 = vpop.permute.xlu0 %1395
  %1397 = vrot.lane.b32.xlu0 %v1391, 110
  %v1398 = vpop.permute.xlu0 %1397
  %1399 = vrot.lane.b32.xlu0 %v1392, 110
  %v1400 = vpop.permute.xlu0 %1399
  %1401 = vrot.lane.b32.xlu0 %v1393, 110
  %v1402 = vpop.permute.xlu0 %1401
  %1403 = vrot.lane.b32.xlu0 %v1394, 110
  %v1404 = vpop.permute.xlu0 %1403
  %vm1405 = vcmask 900096
  %v1406 = vsel %vm1405, %v1396, %v1398
  %v1407 = vsel %vm1405, %v1398, %v1400
  %v1408 = vsel %vm1405, %v1400, %v1402
  %v1409 = vsel %vm1405, %v1402, %v1404
  %v1411 = vsel %vm137, %v1372, 0
  %v1414 = vsel %vm137, %v1373, 0
  %v1417 = vsel %vm144, %v1406, 0
  %v1420 = vsel %vm144, %v1407, 0
  %v1423 = vsel %vm144, %v1408, 0
  %v1426 = vsel %vm144, %v1409, 0
  %1428 = vmatprep.subr.bf16.mxu0 0
  %1429 = vmatpush1.bf16.msra.mxu0 0
  %1430 = vmatprep.subr.bf16.mxu0 0
  %1431 = vmatpush1.bf16.msra.mxu0 0
  %1432 = vmatprep.subr.bf16.mxu0 0
  %1433 = vmatpush1.bf16.msra.mxu0 0
  %1434 = vmatprep.subr.bf16.mxu0 0
  %1435 = vmatpush1.bf16.msra.mxu0 0
  %1436 = vmatprep.subr.bf16.mxu0 0
  %1437 = vmatpush1.bf16.msra.mxu0 0
  %1438 = vmatprep.subr.bf16.mxu0 0
  %1439 = vmatpush1.bf16.msra.mxu0 0
  %1440 = vmatprep.subr.bf16.mxu0 0
  %1441 = vmatpush1.bf16.msra.mxu0 0
  %1442 = vmatprep.subr.bf16.mxu0 %v1420
  %1443 = vmatpush1.bf16.msra.mxu0 %v1417
  %1444 = vmatprep.subr.bf16.mxu0 0
  %1445 = vmatpush2.bf16.msra.mxu0 0
  %1446 = vmatprep.subr.bf16.mxu0 0
  %1447 = vmatpush2.bf16.msra.mxu0 0
  %1448 = vmatprep.subr.bf16.mxu0 0
  %1449 = vmatpush2.bf16.msra.mxu0 0
  %1450 = vmatprep.subr.bf16.mxu0 0
  %1451 = vmatpush2.bf16.msra.mxu0 0
  %1452 = vmatprep.subr.bf16.mxu0 0
  %1453 = vmatpush2.bf16.msra.mxu0 0
  %1454 = vmatprep.subr.bf16.mxu0 0
  %1455 = vmatpush2.bf16.msra.mxu0 0
  %1456 = vmatprep.subr.bf16.mxu0 0
  %1457 = vmatpush2.bf16.msra.mxu0 0
  %1458 = vmatprep.subr.bf16.mxu0 0
  %1459 = vmatpush2.bf16.msra.mxu0 0
  %1460 = vmatprep.mubr.bf16.mxu0 0
  %1461 = vmatmul.mubr.bf16.gmra.mxu0 %v1411
  %v1462 = vpop.f32.mrf.mxu0
  %v1463 = vadd.f32 0.0, %v1462
  %v1464 = vpop.f32.mrf.mxu0
  %v1465 = vadd.f32 0.0, %v1464
  %v1466 = vpop.f32.mrf.mxu0
  %v1467 = vadd.f32 0.0, %v1466
  %v1468 = vpop.f32.mrf.mxu0
  %v1469 = vadd.f32 0.0, %v1468
  %1470 = vmatprep.mubr.bf16.mxu0 0
  %1471 = vmatmul.mubr.bf16.gmra.mxu0 %v1414
  %v1472 = vpop.f32.mrf.mxu0
  %v1473 = vadd.f32 0.0, %v1472
  %v1474 = vpop.f32.mrf.mxu0
  %v1475 = vadd.f32 0.0, %v1474
  %v1476 = vpop.f32.mrf.mxu0
  %v1477 = vadd.f32 0.0, %v1476
  %v1478 = vpop.f32.mrf.mxu0
  %v1479 = vadd.f32 0.0, %v1478
  %1480 = vdwg.mxu0
  %1481 = vmatprep.subr.bf16.mxu0 0
  %1482 = vmatpush1.bf16.msra.mxu0 0
  %1483 = vmatprep.subr.bf16.mxu0 0
  %1484 = vmatpush1.bf16.msra.mxu0 0
  %1485 = vmatprep.subr.bf16.mxu0 0
  %1486 = vmatpush1.bf16.msra.mxu0 0
  %1487 = vmatprep.subr.bf16.mxu0 0
  %1488 = vmatpush1.bf16.msra.mxu0 0
  %1489 = vmatprep.subr.bf16.mxu0 0
  %1490 = vmatpush1.bf16.msra.mxu0 0
  %1491 = vmatprep.subr.bf16.mxu0 0
  %1492 = vmatpush1.bf16.msra.mxu0 0
  %1493 = vmatprep.subr.bf16.mxu0 0
  %1494 = vmatpush1.bf16.msra.mxu0 0
  %1495 = vmatprep.subr.bf16.mxu0 %v1426
  %1496 = vmatpush1.bf16.msra.mxu0 %v1423
  %1497 = vmatprep.subr.bf16.mxu0 0
  %1498 = vmatpush2.bf16.msra.mxu0 0
  %1499 = vmatprep.subr.bf16.mxu0 0
  %1500 = vmatpush2.bf16.msra.mxu0 0
  %1501 = vmatprep.subr.bf16.mxu0 0
  %1502 = vmatpush2.bf16.msra.mxu0 0
  %1503 = vmatprep.subr.bf16.mxu0 0
  %1504 = vmatpush2.bf16.msra.mxu0 0
  %1505 = vmatprep.subr.bf16.mxu0 0
  %1506 = vmatpush2.bf16.msra.mxu0 0
  %1507 = vmatprep.subr.bf16.mxu0 0
  %1508 = vmatpush2.bf16.msra.mxu0 0
  %1509 = vmatprep.subr.bf16.mxu0 0
  %1510 = vmatpush2.bf16.msra.mxu0 0
  %1511 = vmatprep.subr.bf16.mxu0 0
  %1512 = vmatpush2.bf16.msra.mxu0 0
  %1513 = vmatprep.mubr.bf16.mxu0 0
  %1514 = vmatmul.mubr.bf16.gmra.mxu0 %v1411
  %v1515 = vpop.f32.mrf.mxu0
  %v1516 = vadd.f32 0.0, %v1515
  %v1517 = vpop.f32.mrf.mxu0
  %v1518 = vadd.f32 0.0, %v1517
  %v1519 = vpop.f32.mrf.mxu0
  %v1520 = vadd.f32 0.0, %v1519
  %v1521 = vpop.f32.mrf.mxu0
  %v1522 = vadd.f32 0.0, %v1521
  %1523 = vmatprep.mubr.bf16.mxu0 0
  %1524 = vmatmul.mubr.bf16.gmra.mxu0 %v1414
  %v1525 = vpop.f32.mrf.mxu0
  %v1526 = vadd.f32 0.0, %v1525
  %v1527 = vpop.f32.mrf.mxu0
  %v1528 = vadd.f32 0.0, %v1527
  %v1529 = vpop.f32.mrf.mxu0
  %v1530 = vadd.f32 0.0, %v1529
  %v1531 = vpop.f32.mrf.mxu0
  %v1532 = vadd.f32 0.0, %v1531
  %1533 = vdwg.mxu0
  %v1534 = vadd.f32 %v1286, %v1463
  %v1535 = vadd.f32 %v1287, %v1465
  %v1536 = vadd.f32 %v1288, %v1516
  %v1537 = vadd.f32 %v1289, %v1518
  %v1538 = vadd.f32 %v1290, %v1467
  %v1539 = vadd.f32 %v1291, %v1469
  %v1540 = vadd.f32 %v1292, %v1520
  %v1541 = vadd.f32 %v1293, %v1522
  %v1542 = vadd.f32 %v1294, %v1473
  %v1543 = vadd.f32 %v1295, %v1475
  %v1544 = vadd.f32 %v1296, %v1526
  %v1545 = vadd.f32 %v1297, %v1528
  %v1546 = vadd.f32 %v1298, %v1477
  %v1547 = vadd.f32 %v1299, %v1479
  %v1548 = vadd.f32 %v1300, %v1530
  %v1549 = vadd.f32 %v1301, %v1532
  %v1550 = vld [vmem:[%s1] sm:$0x88]
  %v1551 = vld [vmem:[%s1 + $0x8] sm:$0x88]
  %s1552 = scalar_lea.vmem %s2, 96
  %v1553 = vld [vmem:[%s1552] sm:$0xf]
  %v1554 = vld [vmem:[%s1552 + $0x4] sm:$0xf]
  %v1555 = vld [vmem:[%s1552 + $0x8] sm:$0xf]
  %v1556 = vld [vmem:[%s1552 + $0xc] sm:$0xf]
  %v1559 = vunpack.c.l.b16 %v1550
  %v1560 = vunpack.c.h.b16 %v1550
  %v1561 = vunpack.c.l.b16 %v1551
  %v1562 = vunpack.c.h.b16 %v1551
  %v1563 = vpack.c.b16 %v1559, %v1559
  %v1564 = vpack.c.b16 %v1560, %v1560
  %v1565 = vpack.c.b16 %v1561, %v1561
  %v1566 = vpack.c.b16 %v1562, %v1562
  %v1568 = vpack.i.b16 %v1563, %v1563
  %v1570 = vlaneseq
  %v1571 = vshrl.u32 %v1570, 7
  %v1572 = vsub.s32 3, %v1571
  %v1573 = vrot.slane %v1568, %v1572
  %v1575 = vpack.i.b16 %v1564, %v1564
  %v1577 = vlaneseq
  %v1578 = vshrl.u32 %v1577, 7
  %v1579 = vsub.s32 3, %v1578
  %v1580 = vrot.slane %v1575, %v1579
  %v1582 = vpack.i.b16 %v1565, %v1565
  %v1584 = vlaneseq
  %v1585 = vshrl.u32 %v1584, 7
  %v1586 = vsub.s32 3, %v1585
  %v1587 = vrot.slane %v1582, %v1586
  %v1589 = vpack.i.b16 %v1566, %v1566
  %v1591 = vlaneseq
  %v1592 = vshrl.u32 %v1591, 7
  %v1593 = vsub.s32 3, %v1592
  %v1594 = vrot.slane %v1589, %v1593
  %v1599 = vunpack.c.l.b16 %v1573
  %v1600 = vunpack.c.l.b16 %v1580
  %v1601 = vunpack.c.l.b16 %v1587
  %v1602 = vunpack.c.l.b16 %v1594
  %v1603 = vpack.c.b16 %v1600, %v1599
  %v1604 = vpack.c.b16 %v1602, %v1601
  %1605 = vrot.lane.b32.xlu0 %v1603, 32
  %v1606 = vpop.permute.xlu0 %1605
  %1607 = vrot.lane.b32.xlu0 %v1604, 32
  %v1608 = vpop.permute.xlu0 %1607
  %v1609 = vrot.slane %v1606, 4
  %v1610 = vrot.slane %v1608, 4
  %vm1611 = vcmask 261120
  %v1612 = vsel %vm1611, %v1609, %v1606
  %v1613 = vsel %vm336, %v1609, %v1610
  %v1614 = vsel %vm1611, %v1613, %v1608
  %v1618 = vmul.bf16 %v279, %v1612
  %v1619 = vmul.bf16 %v280, %v1614
  %v1620 = vmul.bf16 %v281, %v1610
  %v1621 = vmul.bf16 %v282, %v1612
  %v1622 = vmul.bf16 %v283, %v1614
  %v1623 = vmul.bf16 %v284, %v1610
  %v1628 = vunpack.c.l.b16 %v1553
  %v1629 = vunpack.c.l.b16 %v1554
  %v1630 = vunpack.c.l.b16 %v1555
  %v1631 = vunpack.c.l.b16 %v1556
  %v1632 = vpack.c.b16 %v1629, %v1628
  %v1633 = vpack.c.b16 %v1631, %v1630
  %v1640 = vunpack.c.l.b16 %v1618
  %v1641 = vunpack.c.h.b16 %v1618
  %v1642 = vunpack.c.l.b16 %v1619
  %v1643 = vunpack.c.h.b16 %v1619
  %v1644 = vunpack.c.l.b16 %v1620
  %v1645 = vunpack.c.l.b16 %v1621
  %v1646 = vunpack.c.h.b16 %v1621
  %v1647 = vunpack.c.l.b16 %v1622
  %v1648 = vunpack.c.h.b16 %v1622
  %v1649 = vunpack.c.l.b16 %v1623
  %v1650 = vpack.c.b16 %v1645, %v1640
  %v1651 = vpack.c.b16 %v1646, %v1641
  %v1652 = vpack.c.b16 %v1647, %v1642
  %v1653 = vpack.c.b16 %v1648, %v1643
  %v1654 = vpack.c.b16 %v1649, %v1644
  %1655 = vrot.lane.b32.xlu0 %v1650, 96
  %v1656 = vpop.permute.xlu0 %1655
  %1657 = vrot.lane.b32.xlu0 %v1651, 96
  %v1658 = vpop.permute.xlu0 %1657
  %1659 = vrot.lane.b32.xlu0 %v1652, 96
  %v1660 = vpop.permute.xlu0 %1659
  %1661 = vrot.lane.b32.xlu0 %v1653, 96
  %v1662 = vpop.permute.xlu0 %1661
  %1663 = vrot.lane.b32.xlu0 %v1654, 96
  %v1664 = vpop.permute.xlu0 %1663
  %vm1665 = vcmask 785408
  %v1666 = vsel %vm1665, %v1656, %v1658
  %v1667 = vsel %vm1665, %v1658, %v1660
  %v1668 = vsel %vm1665, %v1660, %v1662
  %v1669 = vsel %vm1665, %v1662, %v1664
  %v1671 = vsel %vm137, %v1632, 0
  %v1674 = vsel %vm137, %v1633, 0
  %v1677 = vsel %vm144, %v1666, 0
  %v1680 = vsel %vm144, %v1667, 0
  %v1683 = vsel %vm144, %v1668, 0
  %v1686 = vsel %vm144, %v1669, 0
  %1688 = vmatprep.subr.bf16.mxu0 0
  %1689 = vmatpush1.bf16.msra.mxu0 0
  %1690 = vmatprep.subr.bf16.mxu0 0
  %1691 = vmatpush1.bf16.msra.mxu0 0
  %1692 = vmatprep.subr.bf16.mxu0 0
  %1693 = vmatpush1.bf16.msra.mxu0 0
  %1694 = vmatprep.subr.bf16.mxu0 0
  %1695 = vmatpush1.bf16.msra.mxu0 0
  %1696 = vmatprep.subr.bf16.mxu0 0
  %1697 = vmatpush1.bf16.msra.mxu0 0
  %1698 = vmatprep.subr.bf16.mxu0 0
  %1699 = vmatpush1.bf16.msra.mxu0 0
  %1700 = vmatprep.subr.bf16.mxu0 0
  %1701 = vmatpush1.bf16.msra.mxu0 0
  %1702 = vmatprep.subr.bf16.mxu0 %v1680
  %1703 = vmatpush1.bf16.msra.mxu0 %v1677
  %1704 = vmatprep.subr.bf16.mxu0 0
  %1705 = vmatpush2.bf16.msra.mxu0 0
  %1706 = vmatprep.subr.bf16.mxu0 0
  %1707 = vmatpush2.bf16.msra.mxu0 0
  %1708 = vmatprep.subr.bf16.mxu0 0
  %1709 = vmatpush2.bf16.msra.mxu0 0
  %1710 = vmatprep.subr.bf16.mxu0 0
  %1711 = vmatpush2.bf16.msra.mxu0 0
  %1712 = vmatprep.subr.bf16.mxu0 0
  %1713 = vmatpush2.bf16.msra.mxu0 0
  %1714 = vmatprep.subr.bf16.mxu0 0
  %1715 = vmatpush2.bf16.msra.mxu0 0
  %1716 = vmatprep.subr.bf16.mxu0 0
  %1717 = vmatpush2.bf16.msra.mxu0 0
  %1718 = vmatprep.subr.bf16.mxu0 0
  %1719 = vmatpush2.bf16.msra.mxu0 0
  %1720 = vmatprep.mubr.bf16.mxu0 0
  %1721 = vmatmul.mubr.bf16.gmra.mxu0 %v1671
  %v1722 = vpop.f32.mrf.mxu0
  %v1723 = vadd.f32 0.0, %v1722
  %v1724 = vpop.f32.mrf.mxu0
  %v1725 = vadd.f32 0.0, %v1724
  %v1726 = vpop.f32.mrf.mxu0
  %v1727 = vadd.f32 0.0, %v1726
  %v1728 = vpop.f32.mrf.mxu0
  %v1729 = vadd.f32 0.0, %v1728
  %1730 = vmatprep.mubr.bf16.mxu0 0
  %1731 = vmatmul.mubr.bf16.gmra.mxu0 %v1674
  %v1732 = vpop.f32.mrf.mxu0
  %v1733 = vadd.f32 0.0, %v1732
  %v1734 = vpop.f32.mrf.mxu0
  %v1735 = vadd.f32 0.0, %v1734
  %v1736 = vpop.f32.mrf.mxu0
  %v1737 = vadd.f32 0.0, %v1736
  %v1738 = vpop.f32.mrf.mxu0
  %v1739 = vadd.f32 0.0, %v1738
  %1740 = vdwg.mxu0
  %1741 = vmatprep.subr.bf16.mxu0 0
  %1742 = vmatpush1.bf16.msra.mxu0 0
  %1743 = vmatprep.subr.bf16.mxu0 0
  %1744 = vmatpush1.bf16.msra.mxu0 0
  %1745 = vmatprep.subr.bf16.mxu0 0
  %1746 = vmatpush1.bf16.msra.mxu0 0
  %1747 = vmatprep.subr.bf16.mxu0 0
  %1748 = vmatpush1.bf16.msra.mxu0 0
  %1749 = vmatprep.subr.bf16.mxu0 0
  %1750 = vmatpush1.bf16.msra.mxu0 0
  %1751 = vmatprep.subr.bf16.mxu0 0
  %1752 = vmatpush1.bf16.msra.mxu0 0
  %1753 = vmatprep.subr.bf16.mxu0 0
  %1754 = vmatpush1.bf16.msra.mxu0 0
  %1755 = vmatprep.subr.bf16.mxu0 %v1686
  %1756 = vmatpush1.bf16.msra.mxu0 %v1683
  %1757 = vmatprep.subr.bf16.mxu0 0
  %1758 = vmatpush2.bf16.msra.mxu0 0
  %1759 = vmatprep.subr.bf16.mxu0 0
  %1760 = vmatpush2.bf16.msra.mxu0 0
  %1761 = vmatprep.subr.bf16.mxu0 0
  %1762 = vmatpush2.bf16.msra.mxu0 0
  %1763 = vmatprep.subr.bf16.mxu0 0
  %1764 = vmatpush2.bf16.msra.mxu0 0
  %1765 = vmatprep.subr.bf16.mxu0 0
  %1766 = vmatpush2.bf16.msra.mxu0 0
  %1767 = vmatprep.subr.bf16.mxu0 0
  %1768 = vmatpush2.bf16.msra.mxu0 0
  %1769 = vmatprep.subr.bf16.mxu0 0
  %1770 = vmatpush2.bf16.msra.mxu0 0
  %1771 = vmatprep.subr.bf16.mxu0 0
  %1772 = vmatpush2.bf16.msra.mxu0 0
  %1773 = vmatprep.mubr.bf16.mxu0 0
  %1774 = vmatmul.mubr.bf16.gmra.mxu0 %v1671
  %v1775 = vpop.f32.mrf.mxu0
  %v1776 = vadd.f32 0.0, %v1775
  %v1777 = vpop.f32.mrf.mxu0
  %v1778 = vadd.f32 0.0, %v1777
  %v1779 = vpop.f32.mrf.mxu0
  %v1780 = vadd.f32 0.0, %v1779
  %v1781 = vpop.f32.mrf.mxu0
  %v1782 = vadd.f32 0.0, %v1781
  %1783 = vmatprep.mubr.bf16.mxu0 0
  %1784 = vmatmul.mubr.bf16.gmra.mxu0 %v1674
  %v1785 = vpop.f32.mrf.mxu0
  %v1786 = vadd.f32 0.0, %v1785
  %v1787 = vpop.f32.mrf.mxu0
  %v1788 = vadd.f32 0.0, %v1787
  %v1789 = vpop.f32.mrf.mxu0
  %v1790 = vadd.f32 0.0, %v1789
  %v1791 = vpop.f32.mrf.mxu0
  %v1792 = vadd.f32 0.0, %v1791
  %1793 = vdwg.mxu0
  %v1794 = vadd.f32 %v1534, %v1723
  %v1795 = vadd.f32 %v1535, %v1725
  %v1796 = vadd.f32 %v1536, %v1776
  %v1797 = vadd.f32 %v1537, %v1778
  %v1798 = vadd.f32 %v1538, %v1727
  %v1799 = vadd.f32 %v1539, %v1729
  %v1800 = vadd.f32 %v1540, %v1780
  %v1801 = vadd.f32 %v1541, %v1782
  %v1802 = vadd.f32 %v1542, %v1733
  %v1803 = vadd.f32 %v1543, %v1735
  %v1804 = vadd.f32 %v1544, %v1786
  %v1805 = vadd.f32 %v1545, %v1788
  %v1806 = vadd.f32 %v1546, %v1737
  %v1807 = vadd.f32 %v1547, %v1739
  %v1808 = vadd.f32 %v1548, %v1790
  %v1809 = vadd.f32 %v1549, %v1792
  %s1810 = scalar_lea.vmem %s2, 112
  %v1811 = vld [vmem:[%s1810] sm:$0xf]
  %v1812 = vld [vmem:[%s1810 + $0x4] sm:$0xf]
  %v1813 = vld [vmem:[%s1810 + $0x8] sm:$0xf]
  %v1814 = vld [vmem:[%s1810 + $0xc] sm:$0xf]
  %v1815 = vshrl.u32 %v1563, 16
  %v1816 = vpack.i.b16 %v1815, %v1815
  %v1818 = vlaneseq
  %v1819 = vshrl.u32 %v1818, 7
  %v1820 = vsub.s32 3, %v1819
  %v1821 = vrot.slane %v1816, %v1820
  %v1822 = vshrl.u32 %v1564, 16
  %v1823 = vpack.i.b16 %v1822, %v1822
  %v1825 = vlaneseq
  %v1826 = vshrl.u32 %v1825, 7
  %v1827 = vsub.s32 3, %v1826
  %v1828 = vrot.slane %v1823, %v1827
  %v1829 = vshrl.u32 %v1565, 16
  %v1830 = vpack.i.b16 %v1829, %v1829
  %v1832 = vlaneseq
  %v1833 = vshrl.u32 %v1832, 7
  %v1834 = vsub.s32 3, %v1833
  %v1835 = vrot.slane %v1830, %v1834
  %v1836 = vshrl.u32 %v1566, 16
  %v1837 = vpack.i.b16 %v1836, %v1836
  %v1839 = vlaneseq
  %v1840 = vshrl.u32 %v1839, 7
  %v1841 = vsub.s32 3, %v1840
  %v1842 = vrot.slane %v1837, %v1841
  %v1847 = vunpack.c.l.b16 %v1821
  %v1848 = vunpack.c.l.b16 %v1828
  %v1849 = vunpack.c.l.b16 %v1835
  %v1850 = vunpack.c.l.b16 %v1842
  %v1851 = vpack.c.b16 %v1848, %v1847
  %v1852 = vpack.c.b16 %v1850, %v1849
  %1853 = vrot.lane.b32.xlu0 %v1851, 33
  %v1854 = vpop.permute.xlu0 %1853
  %1855 = vrot.lane.b32.xlu0 %v1852, 33
  %v1856 = vpop.permute.xlu0 %1855
  %v1857 = vrot.slane %v1854, 4
  %v1858 = vrot.slane %v1856, 4
  %vm1859 = vcmask 269312
  %v1860 = vsel %vm1859, %v1857, %v1854
  %v1861 = vsel %vm336, %v1857, %v1858
  %v1862 = vsel %vm1859, %v1861, %v1856
  %v1866 = vmul.bf16 %v279, %v1860
  %v1867 = vmul.bf16 %v280, %v1862
  %v1868 = vmul.bf16 %v281, %v1858
  %v1869 = vmul.bf16 %v282, %v1860
  %v1870 = vmul.bf16 %v283, %v1862
  %v1871 = vmul.bf16 %v284, %v1858
  %v1876 = vunpack.c.l.b16 %v1811
  %v1877 = vunpack.c.l.b16 %v1812
  %v1878 = vunpack.c.l.b16 %v1813
  %v1879 = vunpack.c.l.b16 %v1814
  %v1880 = vpack.c.b16 %v1877, %v1876
  %v1881 = vpack.c.b16 %v1879, %v1878
  %v1888 = vunpack.c.l.b16 %v1866
  %v1889 = vunpack.c.h.b16 %v1866
  %v1890 = vunpack.c.l.b16 %v1867
  %v1891 = vunpack.c.h.b16 %v1867
  %v1892 = vunpack.c.l.b16 %v1868
  %v1893 = vunpack.c.l.b16 %v1869
  %v1894 = vunpack.c.h.b16 %v1869
  %v1895 = vunpack.c.l.b16 %v1870
  %v1896 = vunpack.c.h.b16 %v1870
  %v1897 = vunpack.c.l.b16 %v1871
  %v1898 = vpack.c.b16 %v1893, %v1888
  %v1899 = vpack.c.b16 %v1894, %v1889
  %v1900 = vpack.c.b16 %v1895, %v1890
  %v1901 = vpack.c.b16 %v1896, %v1891
  %v1902 = vpack.c.b16 %v1897, %v1892
  %1903 = vrot.lane.b32.xlu0 %v1898, 95
  %v1904 = vpop.permute.xlu0 %1903
  %1905 = vrot.lane.b32.xlu0 %v1899, 95
  %v1906 = vpop.permute.xlu0 %1905
  %1907 = vrot.lane.b32.xlu0 %v1900, 95
  %v1908 = vpop.permute.xlu0 %1907
  %1909 = vrot.lane.b32.xlu0 %v1901, 95
  %v1910 = vpop.permute.xlu0 %1909
  %1911 = vrot.lane.b32.xlu0 %v1902, 95
  %v1912 = vpop.permute.xlu0 %1911
  %vm1913 = vcmask 777216
  %v1914 = vsel %vm1913, %v1904, %v1906
  %v1915 = vsel %vm1913, %v1906, %v1908
  %v1916 = vsel %vm1913, %v1908, %v1910
  %v1917 = vsel %vm1913, %v1910, %v1912
  %v1919 = vsel %vm137, %v1880, 0
  %v1922 = vsel %vm137, %v1881, 0
  %v1925 = vsel %vm144, %v1914, 0
  %v1928 = vsel %vm144, %v1915, 0
  %v1931 = vsel %vm144, %v1916, 0
  %v1934 = vsel %vm144, %v1917, 0
  %1936 = vmatprep.subr.bf16.mxu0 0
  %1937 = vmatpush1.bf16.msra.mxu0 0
  %1938 = vmatprep.subr.bf16.mxu0 0
  %1939 = vmatpush1.bf16.msra.mxu0 0
  %1940 = vmatprep.subr.bf16.mxu0 0
  %1941 = vmatpush1.bf16.msra.mxu0 0
  %1942 = vmatprep.subr.bf16.mxu0 0
  %1943 = vmatpush1.bf16.msra.mxu0 0
  %1944 = vmatprep.subr.bf16.mxu0 0
  %1945 = vmatpush1.bf16.msra.mxu0 0
  %1946 = vmatprep.subr.bf16.mxu0 0
  %1947 = vmatpush1.bf16.msra.mxu0 0
  %1948 = vmatprep.subr.bf16.mxu0 0
  %1949 = vmatpush1.bf16.msra.mxu0 0
  %1950 = vmatprep.subr.bf16.mxu0 %v1928
  %1951 = vmatpush1.bf16.msra.mxu0 %v1925
  %1952 = vmatprep.subr.bf16.mxu0 0
  %1953 = vmatpush2.bf16.msra.mxu0 0
  %1954 = vmatprep.subr.bf16.mxu0 0
  %1955 = vmatpush2.bf16.msra.mxu0 0
  %1956 = vmatprep.subr.bf16.mxu0 0
  %1957 = vmatpush2.bf16.msra.mxu0 0
  %1958 = vmatprep.subr.bf16.mxu0 0
  %1959 = vmatpush2.bf16.msra.mxu0 0
  %1960 = vmatprep.subr.bf16.mxu0 0
  %1961 = vmatpush2.bf16.msra.mxu0 0
  %1962 = vmatprep.subr.bf16.mxu0 0
  %1963 = vmatpush2.bf16.msra.mxu0 0
  %1964 = vmatprep.subr.bf16.mxu0 0
  %1965 = vmatpush2.bf16.msra.mxu0 0
  %1966 = vmatprep.subr.bf16.mxu0 0
  %1967 = vmatpush2.bf16.msra.mxu0 0
  %1968 = vmatprep.mubr.bf16.mxu0 0
  %1969 = vmatmul.mubr.bf16.gmra.mxu0 %v1919
  %v1970 = vpop.f32.mrf.mxu0
  %v1971 = vadd.f32 0.0, %v1970
  %v1972 = vpop.f32.mrf.mxu0
  %v1973 = vadd.f32 0.0, %v1972
  %v1974 = vpop.f32.mrf.mxu0
  %v1975 = vadd.f32 0.0, %v1974
  %v1976 = vpop.f32.mrf.mxu0
  %v1977 = vadd.f32 0.0, %v1976
  %1978 = vmatprep.mubr.bf16.mxu0 0
  %1979 = vmatmul.mubr.bf16.gmra.mxu0 %v1922
  %v1980 = vpop.f32.mrf.mxu0
  %v1981 = vadd.f32 0.0, %v1980
  %v1982 = vpop.f32.mrf.mxu0
  %v1983 = vadd.f32 0.0, %v1982
  %v1984 = vpop.f32.mrf.mxu0
  %v1985 = vadd.f32 0.0, %v1984
  %v1986 = vpop.f32.mrf.mxu0
  %v1987 = vadd.f32 0.0, %v1986
  %1988 = vdwg.mxu0
  %1989 = vmatprep.subr.bf16.mxu0 0
  %1990 = vmatpush1.bf16.msra.mxu0 0
  %1991 = vmatprep.subr.bf16.mxu0 0
  %1992 = vmatpush1.bf16.msra.mxu0 0
  %1993 = vmatprep.subr.bf16.mxu0 0
  %1994 = vmatpush1.bf16.msra.mxu0 0
  %1995 = vmatprep.subr.bf16.mxu0 0
  %1996 = vmatpush1.bf16.msra.mxu0 0
  %1997 = vmatprep.subr.bf16.mxu0 0
  %1998 = vmatpush1.bf16.msra.mxu0 0
  %1999 = vmatprep.subr.bf16.mxu0 0
  %2000 = vmatpush1.bf16.msra.mxu0 0
  %2001 = vmatprep.subr.bf16.mxu0 0
  %2002 = vmatpush1.bf16.msra.mxu0 0
  %2003 = vmatprep.subr.bf16.mxu0 %v1934
  %2004 = vmatpush1.bf16.msra.mxu0 %v1931
  %2005 = vmatprep.subr.bf16.mxu0 0
  %2006 = vmatpush2.bf16.msra.mxu0 0
  %2007 = vmatprep.subr.bf16.mxu0 0
  %2008 = vmatpush2.bf16.msra.mxu0 0
  %2009 = vmatprep.subr.bf16.mxu0 0
  %2010 = vmatpush2.bf16.msra.mxu0 0
  %2011 = vmatprep.subr.bf16.mxu0 0
  %2012 = vmatpush2.bf16.msra.mxu0 0
  %2013 = vmatprep.subr.bf16.mxu0 0
  %2014 = vmatpush2.bf16.msra.mxu0 0
  %2015 = vmatprep.subr.bf16.mxu0 0
  %2016 = vmatpush2.bf16.msra.mxu0 0
  %2017 = vmatprep.subr.bf16.mxu0 0
  %2018 = vmatpush2.bf16.msra.mxu0 0
  %2019 = vmatprep.subr.bf16.mxu0 0
  %2020 = vmatpush2.bf16.msra.mxu0 0
  %2021 = vmatprep.mubr.bf16.mxu0 0
  %2022 = vmatmul.mubr.bf16.gmra.mxu0 %v1919
  %v2023 = vpop.f32.mrf.mxu0
  %v2024 = vadd.f32 0.0, %v2023
  %v2025 = vpop.f32.mrf.mxu0
  %v2026 = vadd.f32 0.0, %v2025
  %v2027 = vpop.f32.mrf.mxu0
  %v2028 = vadd.f32 0.0, %v2027
  %v2029 = vpop.f32.mrf.mxu0
  %v2030 = vadd.f32 0.0, %v2029
  %2031 = vmatprep.mubr.bf16.mxu0 0
  %2032 = vmatmul.mubr.bf16.gmra.mxu0 %v1922
  %v2033 = vpop.f32.mrf.mxu0
  %v2034 = vadd.f32 0.0, %v2033
  %v2035 = vpop.f32.mrf.mxu0
  %v2036 = vadd.f32 0.0, %v2035
  %v2037 = vpop.f32.mrf.mxu0
  %v2038 = vadd.f32 0.0, %v2037
  %v2039 = vpop.f32.mrf.mxu0
  %v2040 = vadd.f32 0.0, %v2039
  %2041 = vdwg.mxu0
  %v2042 = vadd.f32 %v1794, %v1971
  %v2043 = vadd.f32 %v1795, %v1973
  %v2044 = vadd.f32 %v1796, %v2024
  %v2045 = vadd.f32 %v1797, %v2026
  %v2046 = vadd.f32 %v1798, %v1975
  %v2047 = vadd.f32 %v1799, %v1977
  %v2048 = vadd.f32 %v1800, %v2028
  %v2049 = vadd.f32 %v1801, %v2030
  %v2050 = vadd.f32 %v1802, %v1981
  %v2051 = vadd.f32 %v1803, %v1983
  %v2052 = vadd.f32 %v1804, %v2034
  %v2053 = vadd.f32 %v1805, %v2036
  %v2054 = vadd.f32 %v1806, %v1985
  %v2055 = vadd.f32 %v1807, %v1987
  %v2056 = vadd.f32 %v1808, %v2038
  %v2057 = vadd.f32 %v1809, %v2040
  %v2058 = vld [vmem:[%s1 + $0x10] sm:$0x11]
  %v2059 = vld [vmem:[%s1 + $0x18] sm:$0x11]
  %s2060 = scalar_lea.vmem %s2, 128
  %v2061 = vld [vmem:[%s2060] sm:$0xf]
  %v2062 = vld [vmem:[%s2060 + $0x4] sm:$0xf]
  %v2063 = vld [vmem:[%s2060 + $0x8] sm:$0xf]
  %v2064 = vld [vmem:[%s2060 + $0xc] sm:$0xf]
  %v2067 = vunpack.c.l.b16 %v2058
  %v2068 = vunpack.c.h.b16 %v2058
  %v2069 = vunpack.c.l.b16 %v2059
  %v2070 = vunpack.c.h.b16 %v2059
  %v2071 = vpack.c.b16 %v2067, %v2067
  %v2072 = vpack.c.b16 %v2068, %v2068
  %v2073 = vpack.c.b16 %v2069, %v2069
  %v2074 = vpack.c.b16 %v2070, %v2070
  %v2076 = vpack.i.b16 %v2071, %v2071
  %v2078 = vlaneseq
  %v2079 = vshrl.u32 %v2078, 7
  %v2080 = vsub.s32 0, %v2079
  %v2081 = vrot.slane %v2076, %v2080
  %v2083 = vpack.i.b16 %v2072, %v2072
  %v2085 = vlaneseq
  %v2086 = vshrl.u32 %v2085, 7
  %v2087 = vsub.s32 0, %v2086
  %v2088 = vrot.slane %v2083, %v2087
  %v2090 = vpack.i.b16 %v2073, %v2073
  %v2092 = vlaneseq
  %v2093 = vshrl.u32 %v2092, 7
  %v2094 = vsub.s32 0, %v2093
  %v2095 = vrot.slane %v2090, %v2094
  %v2097 = vpack.i.b16 %v2074, %v2074
  %v2099 = vlaneseq
  %v2100 = vshrl.u32 %v2099, 7
  %v2101 = vsub.s32 0, %v2100
  %v2102 = vrot.slane %v2097, %v2101
  %v2107 = vunpack.c.l.b16 %v2081
  %v2108 = vunpack.c.l.b16 %v2088
  %v2109 = vunpack.c.l.b16 %v2095
  %v2110 = vunpack.c.l.b16 %v2102
  %v2111 = vpack.c.b16 %v2108, %v2107
  %v2112 = vpack.c.b16 %v2110, %v2109
  %2113 = vrot.lane.b32.xlu0 %v2111, 34
  %v2114 = vpop.permute.xlu0 %2113
  %2115 = vrot.lane.b32.xlu0 %v2112, 34
  %v2116 = vpop.permute.xlu0 %2115
  %v2117 = vrot.slane %v2114, 4
  %v2118 = vrot.slane %v2116, 4
  %vm2119 = vcmask 277504
  %v2120 = vsel %vm2119, %v2117, %v2114
  %v2121 = vsel %vm336, %v2117, %v2118
  %v2122 = vsel %vm2119, %v2121, %v2116
  %v2126 = vmul.bf16 %v279, %v2120
  %v2127 = vmul.bf16 %v280, %v2122
  %v2128 = vmul.bf16 %v281, %v2118
  %v2129 = vmul.bf16 %v282, %v2120
  %v2130 = vmul.bf16 %v283, %v2122
  %v2131 = vmul.bf16 %v284, %v2118
  %v2136 = vunpack.c.l.b16 %v2061
  %v2137 = vunpack.c.l.b16 %v2062
  %v2138 = vunpack.c.l.b16 %v2063
  %v2139 = vunpack.c.l.b16 %v2064
  %v2140 = vpack.c.b16 %v2137, %v2136
  %v2141 = vpack.c.b16 %v2139, %v2138
  %v2148 = vunpack.c.l.b16 %v2126
  %v2149 = vunpack.c.h.b16 %v2126
  %v2150 = vunpack.c.l.b16 %v2127
  %v2151 = vunpack.c.h.b16 %v2127
  %v2152 = vunpack.c.l.b16 %v2128
  %v2153 = vunpack.c.l.b16 %v2129
  %v2154 = vunpack.c.h.b16 %v2129
  %v2155 = vunpack.c.l.b16 %v2130
  %v2156 = vunpack.c.h.b16 %v2130
  %v2157 = vunpack.c.l.b16 %v2131
  %v2158 = vpack.c.b16 %v2153, %v2148
  %v2159 = vpack.c.b16 %v2154, %v2149
  %v2160 = vpack.c.b16 %v2155, %v2150
  %v2161 = vpack.c.b16 %v2156, %v2151
  %v2162 = vpack.c.b16 %v2157, %v2152
  %2163 = vrot.lane.b32.xlu0 %v2158, 94
  %v2164 = vpop.permute.xlu0 %2163
  %2165 = vrot.lane.b32.xlu0 %v2159, 94
  %v2166 = vpop.permute.xlu0 %2165
  %2167 = vrot.lane.b32.xlu0 %v2160, 94
  %v2168 = vpop.permute.xlu0 %2167
  %2169 = vrot.lane.b32.xlu0 %v2161, 94
  %v2170 = vpop.permute.xlu0 %2169
  %2171 = vrot.lane.b32.xlu0 %v2162, 94
  %v2172 = vpop.permute.xlu0 %2171
  %vm2173 = vcmask 769024
  %v2174 = vsel %vm2173, %v2164, %v2166
  %v2175 = vsel %vm2173, %v2166, %v2168
  %v2176 = vsel %vm2173, %v2168, %v2170
  %v2177 = vsel %vm2173, %v2170, %v2172
  %v2179 = vsel %vm137, %v2140, 0
  %v2182 = vsel %vm137, %v2141, 0
  %v2185 = vsel %vm144, %v2174, 0
  %v2188 = vsel %vm144, %v2175, 0
  %v2191 = vsel %vm144, %v2176, 0
  %v2194 = vsel %vm144, %v2177, 0
  %2196 = vmatprep.subr.bf16.mxu0 0
  %2197 = vmatpush1.bf16.msra.mxu0 0
  %2198 = vmatprep.subr.bf16.mxu0 0
  %2199 = vmatpush1.bf16.msra.mxu0 0
  %2200 = vmatprep.subr.bf16.mxu0 0
  %2201 = vmatpush1.bf16.msra.mxu0 0
  %2202 = vmatprep.subr.bf16.mxu0 0
  %2203 = vmatpush1.bf16.msra.mxu0 0
  %2204 = vmatprep.subr.bf16.mxu0 0
  %2205 = vmatpush1.bf16.msra.mxu0 0
  %2206 = vmatprep.subr.bf16.mxu0 0
  %2207 = vmatpush1.bf16.msra.mxu0 0
  %2208 = vmatprep.subr.bf16.mxu0 0
  %2209 = vmatpush1.bf16.msra.mxu0 0
  %2210 = vmatprep.subr.bf16.mxu0 %v2188
  %2211 = vmatpush1.bf16.msra.mxu0 %v2185
  %2212 = vmatprep.subr.bf16.mxu0 0
  %2213 = vmatpush2.bf16.msra.mxu0 0
  %2214 = vmatprep.subr.bf16.mxu0 0
  %2215 = vmatpush2.bf16.msra.mxu0 0
  %2216 = vmatprep.subr.bf16.mxu0 0
  %2217 = vmatpush2.bf16.msra.mxu0 0
  %2218 = vmatprep.subr.bf16.mxu0 0
  %2219 = vmatpush2.bf16.msra.mxu0 0
  %2220 = vmatprep.subr.bf16.mxu0 0
  %2221 = vmatpush2.bf16.msra.mxu0 0
  %2222 = vmatprep.subr.bf16.mxu0 0
  %2223 = vmatpush2.bf16.msra.mxu0 0
  %2224 = vmatprep.subr.bf16.mxu0 0
  %2225 = vmatpush2.bf16.msra.mxu0 0
  %2226 = vmatprep.subr.bf16.mxu0 0
  %2227 = vmatpush2.bf16.msra.mxu0 0
  %2228 = vmatprep.mubr.bf16.mxu0 0
  %2229 = vmatmul.mubr.bf16.gmra.mxu0 %v2179
  %v2230 = vpop.f32.mrf.mxu0
  %v2231 = vadd.f32 0.0, %v2230
  %v2232 = vpop.f32.mrf.mxu0
  %v2233 = vadd.f32 0.0, %v2232
  %v2234 = vpop.f32.mrf.mxu0
  %v2235 = vadd.f32 0.0, %v2234
  %v2236 = vpop.f32.mrf.mxu0
  %v2237 = vadd.f32 0.0, %v2236
  %2238 = vmatprep.mubr.bf16.mxu0 0
  %2239 = vmatmul.mubr.bf16.gmra.mxu0 %v2182
  %v2240 = vpop.f32.mrf.mxu0
  %v2241 = vadd.f32 0.0, %v2240
  %v2242 = vpop.f32.mrf.mxu0
  %v2243 = vadd.f32 0.0, %v2242
  %v2244 = vpop.f32.mrf.mxu0
  %v2245 = vadd.f32 0.0, %v2244
  %v2246 = vpop.f32.mrf.mxu0
  %v2247 = vadd.f32 0.0, %v2246
  %2248 = vdwg.mxu0
  %2249 = vmatprep.subr.bf16.mxu0 0
  %2250 = vmatpush1.bf16.msra.mxu0 0
  %2251 = vmatprep.subr.bf16.mxu0 0
  %2252 = vmatpush1.bf16.msra.mxu0 0
  %2253 = vmatprep.subr.bf16.mxu0 0
  %2254 = vmatpush1.bf16.msra.mxu0 0
  %2255 = vmatprep.subr.bf16.mxu0 0
  %2256 = vmatpush1.bf16.msra.mxu0 0
  %2257 = vmatprep.subr.bf16.mxu0 0
  %2258 = vmatpush1.bf16.msra.mxu0 0
  %2259 = vmatprep.subr.bf16.mxu0 0
  %2260 = vmatpush1.bf16.msra.mxu0 0
  %2261 = vmatprep.subr.bf16.mxu0 0
  %2262 = vmatpush1.bf16.msra.mxu0 0
  %2263 = vmatprep.subr.bf16.mxu0 %v2194
  %2264 = vmatpush1.bf16.msra.mxu0 %v2191
  %2265 = vmatprep.subr.bf16.mxu0 0
  %2266 = vmatpush2.bf16.msra.mxu0 0
  %2267 = vmatprep.subr.bf16.mxu0 0
  %2268 = vmatpush2.bf16.msra.mxu0 0
  %2269 = vmatprep.subr.bf16.mxu0 0
  %2270 = vmatpush2.bf16.msra.mxu0 0
  %2271 = vmatprep.subr.bf16.mxu0 0
  %2272 = vmatpush2.bf16.msra.mxu0 0
  %2273 = vmatprep.subr.bf16.mxu0 0
  %2274 = vmatpush2.bf16.msra.mxu0 0
  %2275 = vmatprep.subr.bf16.mxu0 0
  %2276 = vmatpush2.bf16.msra.mxu0 0
  %2277 = vmatprep.subr.bf16.mxu0 0
  %2278 = vmatpush2.bf16.msra.mxu0 0
  %2279 = vmatprep.subr.bf16.mxu0 0
  %2280 = vmatpush2.bf16.msra.mxu0 0
  %2281 = vmatprep.mubr.bf16.mxu0 0
  %2282 = vmatmul.mubr.bf16.gmra.mxu0 %v2179
  %v2283 = vpop.f32.mrf.mxu0
  %v2284 = vadd.f32 0.0, %v2283
  %v2285 = vpop.f32.mrf.mxu0
  %v2286 = vadd.f32 0.0, %v2285
  %v2287 = vpop.f32.mrf.mxu0
  %v2288 = vadd.f32 0.0, %v2287
  %v2289 = vpop.f32.mrf.mxu0
  %v2290 = vadd.f32 0.0, %v2289
  %2291 = vmatprep.mubr.bf16.mxu0 0
  %2292 = vmatmul.mubr.bf16.gmra.mxu0 %v2182
  %v2293 = vpop.f32.mrf.mxu0
  %v2294 = vadd.f32 0.0, %v2293
  %v2295 = vpop.f32.mrf.mxu0
  %v2296 = vadd.f32 0.0, %v2295
  %v2297 = vpop.f32.mrf.mxu0
  %v2298 = vadd.f32 0.0, %v2297
  %v2299 = vpop.f32.mrf.mxu0
  %v2300 = vadd.f32 0.0, %v2299
  %2301 = vdwg.mxu0
  %v2302 = vadd.f32 %v2042, %v2231
  %v2303 = vadd.f32 %v2043, %v2233
  %v2304 = vadd.f32 %v2044, %v2284
  %v2305 = vadd.f32 %v2045, %v2286
  %v2306 = vadd.f32 %v2046, %v2235
  %v2307 = vadd.f32 %v2047, %v2237
  %v2308 = vadd.f32 %v2048, %v2288
  %v2309 = vadd.f32 %v2049, %v2290
  %v2310 = vadd.f32 %v2050, %v2241
  %v2311 = vadd.f32 %v2051, %v2243
  %v2312 = vadd.f32 %v2052, %v2294
  %v2313 = vadd.f32 %v2053, %v2296
  %v2314 = vadd.f32 %v2054, %v2245
  %v2315 = vadd.f32 %v2055, %v2247
  %v2316 = vadd.f32 %v2056, %v2298
  %v2317 = vadd.f32 %v2057, %v2300
  %v2318 = vxor.u32 %v2302, 2147483648
  %v2319 = vxor.u32 %v2303, 2147483648
  %v2320 = vxor.u32 %v2304, 2147483648
  %v2321 = vxor.u32 %v2305, 2147483648
  %v2322 = vmul.f32 %v2318, 1.442695
  %v2323 = vpow.pop %v2322
  %v2324 = vmul.f32 %v2319, 1.442695
  %v2325 = vpow.pop %v2324
  %v2326 = vmul.f32 %v2320, 1.442695
  %v2327 = vpow.pop %v2326
  %v2328 = vmul.f32 %v2321, 1.442695
  %v2329 = vpow.pop %v2328
  %v2330 = vadd.f32 %v2323, 1.0
  %v2331 = vadd.f32 %v2325, 1.0
  %v2332 = vadd.f32 %v2327, 1.0
  %v2333 = vadd.f32 %v2329, 1.0
  %v2334 = vrcp.pop %v2330
  %v2335 = vmul.f32 1.0, %v2334
  %v2336 = vrcp.pop %v2331
  %v2337 = vmul.f32 1.0, %v2336
  %v2338 = vrcp.pop %v2332
  %v2339 = vmul.f32 1.0, %v2338
  %v2340 = vrcp.pop %v2333
  %v2341 = vmul.f32 1.0, %v2340
  %v2342 = vxor.u32 %v2306, 2147483648
  %v2343 = vxor.u32 %v2307, 2147483648
  %v2344 = vxor.u32 %v2308, 2147483648
  %v2345 = vxor.u32 %v2309, 2147483648
  %v2346 = vmul.f32 %v2342, 1.442695
  %v2347 = vpow.pop %v2346
  %v2348 = vmul.f32 %v2343, 1.442695
  %v2349 = vpow.pop %v2348
  %v2350 = vmul.f32 %v2344, 1.442695
  %v2351 = vpow.pop %v2350
  %v2352 = vmul.f32 %v2345, 1.442695
  %v2353 = vpow.pop %v2352
  %v2354 = vadd.f32 %v2347, 1.0
  %v2355 = vadd.f32 %v2349, 1.0
  %v2356 = vadd.f32 %v2351, 1.0
  %v2357 = vadd.f32 %v2353, 1.0
  %v2358 = vrcp.pop %v2354
  %v2359 = vmul.f32 1.0, %v2358
  %v2360 = vrcp.pop %v2355
  %v2361 = vmul.f32 1.0, %v2360
  %v2362 = vrcp.pop %v2356
  %v2363 = vmul.f32 1.0, %v2362
  %v2364 = vrcp.pop %v2357
  %v2365 = vmul.f32 1.0, %v2364
  %v2366 = vtanh.pop %v2310
  %v2367 = vtanh.pop %v2311
  %v2368 = vtanh.pop %v2312
  %v2369 = vtanh.pop %v2313
  %v2370 = vxor.u32 %v2314, 2147483648
  %v2371 = vxor.u32 %v2315, 2147483648
  %v2372 = vxor.u32 %v2316, 2147483648
  %v2373 = vxor.u32 %v2317, 2147483648
  %v2374 = vmul.f32 %v2370, 1.442695
  %v2375 = vpow.pop %v2374
  %v2376 = vmul.f32 %v2371, 1.442695
  %v2377 = vpow.pop %v2376
  %v2378 = vmul.f32 %v2372, 1.442695
  %v2379 = vpow.pop %v2378
  %v2380 = vmul.f32 %v2373, 1.442695
  %v2381 = vpow.pop %v2380
  %v2382 = vadd.f32 %v2375, 1.0
  %v2383 = vadd.f32 %v2377, 1.0
  %v2384 = vadd.f32 %v2379, 1.0
  %v2385 = vadd.f32 %v2381, 1.0
  %v2386 = vrcp.pop %v2382
  %v2387 = vmul.f32 1.0, %v2386
  %v2388 = vrcp.pop %v2383
  %v2389 = vmul.f32 1.0, %v2388
  %v2390 = vrcp.pop %v2384
  %v2391 = vmul.f32 1.0, %v2390
  %v2392 = vrcp.pop %v2385
  %v2393 = vmul.f32 1.0, %v2392
  %v2394 = vld [vmem:[%s4] sm:$0xff]
  %v2395 = vld [vmem:[%s4 + $0x8] sm:$0xff]
  %v2396 = vld [vmem:[%s4 + $0x10] sm:$0xff]
  %v2397 = vld [vmem:[%s4 + $0x18] sm:$0xff]
  %v2398 = vmul.f32 %v2359, %v2394
  %v2399 = vmul.f32 %v2361, %v2395
  %v2400 = vmul.f32 %v2363, %v2396
  %v2401 = vmul.f32 %v2365, %v2397
  %v2402 = vmul.f32 %v2335, %v2366
  %v2403 = vmul.f32 %v2337, %v2367
  %v2404 = vmul.f32 %v2339, %v2368
  %v2405 = vmul.f32 %v2341, %v2369
  %v2406 = vadd.f32 %v2398, %v2402
  %v2407 = vadd.f32 %v2399, %v2403
  %v2408 = vadd.f32 %v2400, %v2404
  %v2409 = vadd.f32 %v2401, %v2405
  %v2410 = vtanh.pop %v2406
  %v2411 = vtanh.pop %v2407
  %v2412 = vtanh.pop %v2408
  %v2413 = vtanh.pop %v2409
  %v2414 = vmul.f32 %v2387, %v2410
  %v2415 = vmul.f32 %v2389, %v2411
  %v2416 = vmul.f32 %v2391, %v2412
  %v2417 = vmul.f32 %v2393, %v2413
  %2418 = vst [vmem:[%s5] sm:$0xff] %v2414
  %2419 = vst [vmem:[%s5 + $0x8] sm:$0xff] %v2415
  %2420 = vst [vmem:[%s5 + $0x10] sm:$0xff] %v2416
  %2421 = vst [vmem:[%s5 + $0x18] sm:$0xff] %v2417
  %2422 = vst [vmem:[%s6] sm:$0xff] %v2406
  %2423 = vst [vmem:[%s6 + $0x8] sm:$0xff] %v2407
  %2424 = vst [vmem:[%s6 + $0x10] sm:$0xff] %v2408
  %2425 = vst [vmem:[%s6 + $0x18] sm:$0xff] %v2409
  // Predicated region
  $region22: #{conv_lstm_cell.1} parent=0 // pred_check
    _
  $region23: #{conv_lstm_cell.1} parent=0 // pred_check_branch
    %2427 = sbr.rel (0) target = $region25
  $region24: #{conv_lstm_cell.1} parent=0 // pred_region
    _
  $region25: #{conv_lstm_cell.1} parent=0 // pred_fallthru
    _
  // Predicated region
  $region26: #{conv_lstm_cell.1} parent=0 // pred_check
    _
  $region27: #{conv_lstm_cell.1} parent=0 // pred_check_branch
    %2429 = sbr.rel (0) target = $region29
  $region28: #{conv_lstm_cell.1} parent=0 // pred_region
    _
  $region29: #{conv_lstm_cell.1} parent=0 // pred_fallthru
    _
  // Predicated region
  $region30: #{conv_lstm_cell.1} parent=0 // pred_check
    _
  $region31: #{conv_lstm_cell.1} parent=0 // pred_check_branch
    %2431 = sbr.rel (0) target = $region33
  $region32: #{conv_lstm_cell.1} parent=0 // pred_region
    _
  $region33: #{conv_lstm_cell.1} parent=0 // pred_fallthru
    _
  // Predicated region
  $region34: #{conv_lstm_cell.1} parent=0 // pred_check
    _
  $region35: #{conv_lstm_cell.1} parent=0 // pred_check_branch
    %2433 = sbr.rel (0) target = $region37
  $region36: #{conv_lstm_cell.1} parent=0 // pred_region
    _
  $region37: #{conv_lstm_cell.1} parent=0 // pred_fallthru
    _

</llo_original>
